<compile_context>
chip_gen: v7x
topology: tpu7x:2x2x1
jax: 0.10.0
libtpu: 0.0.40
codegen_flags: <defaults>
</compile_context>

<pallas_src>
import functools

import jax
import jax.numpy as jnp
from jax.experimental import pallas as pl
from jax.experimental.pallas import tpu as pltpu


# ----------------------------------------------------------------------------
# DDPM schedules (pure JAX glue — identical math to the PyTorch helper).
# ----------------------------------------------------------------------------
def ddpm_schedules(beta1, beta2, T):
    assert beta1 < beta2 < 1.0
    beta_t = (beta2 - beta1) * jnp.arange(0, T + 1, dtype=jnp.float32) / T + beta1
    sqrt_beta_t = jnp.sqrt(beta_t)
    alpha_t = 1.0 - beta_t
    log_alpha_t = jnp.log(alpha_t)
    alphabar_t = jnp.exp(jnp.cumsum(log_alpha_t))
    sqrtab = jnp.sqrt(alphabar_t)
    oneover_sqrta = 1.0 / jnp.sqrt(alpha_t)
    sqrtmab = jnp.sqrt(1.0 - alphabar_t)
    mab_over_sqrtmab = (1.0 - alpha_t) / sqrtmab
    return dict(
        alpha_t=alpha_t,
        oneover_sqrta=oneover_sqrta,
        sqrt_beta_t=sqrt_beta_t,
        alphabar_t=alphabar_t,
        sqrtab=sqrtab,
        sqrtmab=sqrtmab,
        mab_over_sqrtmab=mab_over_sqrtmab,
    )


# ----------------------------------------------------------------------------
# Fused Pallas kernel: x_t construction + MLP eps-prediction + per-tile MSE
# partial sum.  One grid step processes one batch tile of BM rows.
# ----------------------------------------------------------------------------
def ddpm_loss_kernel(
    x_ref,      # (BM, SD) f32   flattened input tile
    noise_ref,  # (BM, SD) f32   gaussian noise tile
    a_ref,      # (BM, 1)  f32   sqrtab[_ts]
    b_ref,      # (BM, 1)  f32   sqrtmab[_ts]
    ctx_ref,    # (BM, H)  f32   masked class-embedding contribution
    t_ref,      # (BM, 1)  f32   _ts / n_T
    w1_ref,     # (SD, H)  bf16  (resident across batch tiles)
    wt_ref,     # (1, H)   f32
    b1_ref,     # (1, H)   f32
    w2_ref,     # (H, SD)  bf16  (resident across batch tiles)
    b2_ref,     # (1, SD)  f32
    psum_ref,   # (1, 8, 128) f32  lane-dense per-tile partial sum of sq. error
):
    # forward diffusion blend in f32 on the VPU (no bf16 elementwise -> v5e-safe)
    x_t = a_ref[...] * x_ref[...] + b_ref[...] * noise_ref[...]

    # eps-predictor MLP: bf16 operands into the MXU, f32 accumulation.
    h = jnp.dot(x_t.astype(jnp.bfloat16), w1_ref[...],
                preferred_element_type=jnp.float32)
    # context contribution: precomputed embedding gather (replaces K=10 matmul)
    h = h + ctx_ref[...]
    # time feature: rank-1 (BM,1)x(1,H) as a VPU outer product (replaces K=1 matmul)
    h = h + t_ref[...] * wt_ref[...]
    h = h + b1_ref[...]
    h = jnp.maximum(h, 0.0)
    eps = jnp.dot(h.astype(jnp.bfloat16), w2_ref[...],
                  preferred_element_type=jnp.float32) + b2_ref[...]

    # MSE partial: sum of squared error for this tile (f32), emitted as a
    # lane-dense (8,128) broadcast block; reduced and scaled outside.
    diff = noise_ref[...] - eps
    partial = jnp.sum(diff * diff)
    psum_ref[...] = jnp.full(psum_ref.shape, partial, dtype=jnp.float32)


@functools.partial(jax.jit, static_argnames=("n_T", "drop_prob", "n_classes"))
def ddpm_forward(key, x, c, params, sqrtab, sqrtmab, *, n_T, drop_prob, n_classes):
    """Reproduces DDPM.forward(x, c): returns scalar MSE training loss."""
    B, S, D = x.shape
    SD = S * D
    H = params["w1"].shape[1]

    k_ts, k_noise, k_mask = jax.random.split(key, 3)

    # _ts ~ randint(1, n_T + 1)   (inclusive upper bound matches torch.randint)
    _ts = jax.random.randint(k_ts, (B,), 1, n_T + 1)
    # noise ~ N(0, 1)
    noise = jax.random.normal(k_noise, x.shape, dtype=jnp.float32)
    # context_mask ~ Bernoulli(drop_prob)
    context_mask = jax.random.bernoulli(k_mask, drop_prob, (B,)).astype(jnp.float32)

    # per-sample schedule coefficients (gathers = glue)
    coef_a = sqrtab[_ts].reshape(B, 1)
    coef_b = sqrtmab[_ts].reshape(B, 1)

    # masked class embedding: one_hot(c) @ Wc * (1-mask) expressed as a gather
    keep = (1.0 - context_mask)[:, None]
    ctx = params["wc"][c] * keep                      # (B, H) f32
    # normalized time feature
    t_feat = (_ts.astype(jnp.float32) / float(n_T)).reshape(B, 1)

    x_flat = x.reshape(B, SD)
    noise_flat = noise.reshape(B, SD)

    # weights as bf16 MXU operands; biases / rank-1 term / elementwise stay f32
    w1_bf = params["w1"].astype(jnp.bfloat16)
    w2_bf = params["w2"].astype(jnp.bfloat16)

    # batch tiling: one grid step per BM rows
    BM = min(B, 128)
    assert B % BM == 0, "batch must be divisible by the batch tile"
    num_tiles = B // BM

    args = (
        x_flat, noise_flat, coef_a, coef_b, ctx, t_feat,
        w1_bf, params["wt"], params["b1"], w2_bf, params["b2"],
    )

    in_specs = [
        # per-tile activations: pipeline over the batch grid axis
        pl.BlockSpec((BM, SD), lambda i: (i, 0)),   # x
        pl.BlockSpec((BM, SD), lambda i: (i, 0)),   # noise
        pl.BlockSpec((BM, 1),  lambda i: (i, 0)),   # sqrtab[_ts]
        pl.BlockSpec((BM, 1),  lambda i: (i, 0)),   # sqrtmab[_ts]
        pl.BlockSpec((BM, H),  lambda i: (i, 0)),   # context contribution
        pl.BlockSpec((BM, 1),  lambda i: (i, 0)),   # t / n_T
        # weights: constant block index -> DMA'd once, resident across tiles
        pl.BlockSpec((SD, H),  lambda i: (0, 0)),   # w1 (bf16)
        pl.BlockSpec((1, H),   lambda i: (0, 0)),   # wt
        pl.BlockSpec((1, H),   lambda i: (0, 0)),   # b1
        pl.BlockSpec((H, SD),  lambda i: (0, 0)),   # w2 (bf16)
        pl.BlockSpec((1, SD),  lambda i: (0, 0)),   # b2
    ]
    out_specs = pl.BlockSpec((1, 8, 128), lambda i: (i, 0, 0))
    out_shape = jax.ShapeDtypeStruct((num_tiles, 8, 128), jnp.float32)

    # cost hint for XLA: two big matmuls dominate; bytes = all operands + out
    flops = 4 * B * SD * H
    bytes_accessed = int(
        sum(int(a.size) * a.dtype.itemsize for a in args) + num_tiles * 8 * 128 * 4
    )

    # VMEM budget: weights (x2 buffers) + double-buffered per-tile I/O +
    # headroom for f32 intermediates; capped well under v7x's 64 MiB/TC.
    weight_bytes = sum(int(a.size) * a.dtype.itemsize for a in args[6:])
    tile_bytes = (2 * BM * SD * 4) + (3 * BM * 4) + (BM * H * 4) + (8 * 128 * 4)
    vmem_limit = int(min(48 << 20, 2 * weight_bytes + 2 * tile_bytes + (8 << 20)))

    partials = pl.pallas_call(
        ddpm_loss_kernel,
        out_shape=out_shape,
        grid_spec=pltpu.PrefetchScalarGridSpec(
            num_scalar_prefetch=0,
            grid=(num_tiles,),
            in_specs=in_specs,
            out_specs=out_specs,
        ),
        compiler_params=pltpu.CompilerParams(
            dimension_semantics=("parallel",),   # v7x: both TCs split the batch axis
            vmem_limit_bytes=vmem_limit,
        ),
        cost_estimate=pl.CostEstimate(
            flops=flops, transcendentals=0, bytes_accessed=bytes_accessed
        ),
    )(*args)

    # final reduction of per-tile partials + multiply by precomputed 1/N
    inv_n = 1.0 / float(B * SD)
    loss = jnp.sum(partials[:, 0, 0]) * inv_n
    return loss, (_ts, noise, context_mask)


def reference_loss(x, noise, _ts, context_mask, c, params, sqrtab, sqrtmab, n_T):
    """Pure-JAX reference with identical dtype handling (for correctness check)."""
    B, S, D = x.shape
    a = sqrtab[_ts][:, None, None]
    b = sqrtmab[_ts][:, None, None]
    x_t = (a * x + b * noise).reshape(B, S * D)
    keep = (1.0 - context_mask)[:, None]
    ctx = params["wc"][c] * keep
    t_feat = (_ts.astype(jnp.float32) / float(n_T)).reshape(B, 1)
    h = jnp.dot(x_t.astype(jnp.bfloat16), params["w1"].astype(jnp.bfloat16),
                preferred_element_type=jnp.float32)
    h = h + ctx + t_feat * params["wt"] + params["b1"]
    h = jnp.maximum(h, 0.0)
    eps = jnp.dot(h.astype(jnp.bfloat16), params["w2"].astype(jnp.bfloat16),
                  preferred_element_type=jnp.float32) + params["b2"]
    diff = noise.reshape(B, S * D) - eps
    return jnp.mean(diff * diff)


if __name__ == "__main__":
    # --- sizes (small, consistent with the 3-D broadcast in DDPM.forward) ---
    B, S, D = 8, 8, 128       # x: (batch, seq, feature)
    SD = S * D
    H = 256                   # MLP hidden width
    N_CLASSES = 10
    N_T = 400
    BETAS = (1e-4, 0.02)
    DROP_PROB = 0.1

    sched = ddpm_schedules(BETAS[0], BETAS[1], N_T)
    sqrtab, sqrtmab = sched["sqrtab"], sched["sqrtmab"]

    # --- deterministic synthetic nn_model parameters ---
    kp = jax.random.PRNGKey(42)
    k1, k2, k3, k4 = jax.random.split(kp, 4)
    params = {
        "w1": jax.random.normal(k1, (SD, H), jnp.float32) * (1.0 / jnp.sqrt(SD)),
        "wc": jax.random.normal(k2, (N_CLASSES, H), jnp.float32) * 0.1,
        "wt": jax.random.normal(k3, (1, H), jnp.float32) * 0.1,
        "b1": jnp.zeros((1, H), jnp.float32),
        "w2": jax.random.normal(k4, (H, SD), jnp.float32) * (1.0 / jnp.sqrt(H)),
        "b2": jnp.zeros((1, SD), jnp.float32),
    }

    # --- deterministic example inputs ---
    key = jax.random.PRNGKey(0)
    k_x, k_c, k_fwd = jax.random.split(key, 3)
    x = jax.random.normal(k_x, (B, S, D), jnp.float32)
    c = jax.random.randint(k_c, (B,), 0, N_CLASSES)

    loss, (ts_used, noise_used, mask_used) = ddpm_forward(
        k_fwd, x, c, params, sqrtab, sqrtmab,
        n_T=N_T, drop_prob=DROP_PROB, n_classes=N_CLASSES,
    )
    loss = jax.block_until_ready(loss)

    # sanity check against pure-JAX reference using the same sampled randoms
    ref = reference_loss(
        x, noise_used, ts_used, mask_used, c, params, sqrtab, sqrtmab, N_T
    )
    assert jnp.allclose(loss, ref, rtol=1e-3, atol=1e-3), (loss, ref)

    print("KERNEL_OK")
</pallas_src>

<mosaic_0001>
module attributes {stable_mosaic.version = 11 : i64} {
  func.func @ddpm_loss_kernel(%arg0: i32, %arg1: memref<8x1024xf32, #tpu.memory_space<vmem>>, %arg2: memref<8x1024xf32, #tpu.memory_space<vmem>>, %arg3: memref<8x1xf32, #tpu.memory_space<vmem>>, %arg4: memref<8x1xf32, #tpu.memory_space<vmem>>, %arg5: memref<8x256xf32, #tpu.memory_space<vmem>>, %arg6: memref<8x1xf32, #tpu.memory_space<vmem>>, %arg7: memref<1024x256xbf16, #tpu.memory_space<vmem>>, %arg8: memref<1x256xf32, #tpu.memory_space<vmem>>, %arg9: memref<1x256xf32, #tpu.memory_space<vmem>>, %arg10: memref<256x1024xbf16, #tpu.memory_space<vmem>>, %arg11: memref<1x1024xf32, #tpu.memory_space<vmem>>, %arg12: memref<1x8x128xf32, #tpu.memory_space<vmem>>) attributes {dimension_semantics = [#tpu.dimension_semantics<parallel>], iteration_bounds = array<i64: 1>, scalar_prefetch = 0 : i64, scratch_operands = 0 : i64, tpu.core_type = #tpu.core_type<tc>, window_params = [{transform_indices = @transform_0, window_bounds = array<i64: 8, 1024>}, {transform_indices = @transform_1, window_bounds = array<i64: 8, 1024>}, {transform_indices = @transform_2, window_bounds = array<i64: 8, 1>}, {transform_indices = @transform_3, window_bounds = array<i64: 8, 1>}, {transform_indices = @transform_4, window_bounds = array<i64: 8, 256>}, {transform_indices = @transform_5, window_bounds = array<i64: 8, 1>}, {pipeline_mode = #tpu.pipeline_mode<synchronous>, transform_indices = @transform_6, window_bounds = array<i64: 1024, 256>}, {pipeline_mode = #tpu.pipeline_mode<synchronous>, transform_indices = @transform_7, window_bounds = array<i64: 1, 256>}, {pipeline_mode = #tpu.pipeline_mode<synchronous>, transform_indices = @transform_8, window_bounds = array<i64: 1, 256>}, {pipeline_mode = #tpu.pipeline_mode<synchronous>, transform_indices = @transform_9, window_bounds = array<i64: 256, 1024>}, {pipeline_mode = #tpu.pipeline_mode<synchronous>, transform_indices = @transform_10, window_bounds = array<i64: 1, 1024>}, {transform_indices = @transform_11, window_bounds = array<i64: 1, 8, 128>}]} {
    %c0 = arith.constant 0 : index
    %c0_0 = arith.constant 0 : index
    %0 = vector.load %arg3[%c0, %c0_0] : memref<8x1xf32, #tpu.memory_space<vmem>>, vector<8x1xf32>
    %c0_1 = arith.constant 0 : index
    %c0_2 = arith.constant 0 : index
    %1 = vector.load %arg1[%c0_1, %c0_2] : memref<8x1024xf32, #tpu.memory_space<vmem>>, vector<8x1024xf32>
    %2 = vector.broadcast %0 : vector<8x1xf32> to vector<8x1024xf32>
    %3 = arith.mulf %2, %1 : vector<8x1024xf32>
    %c0_3 = arith.constant 0 : index
    %c0_4 = arith.constant 0 : index
    %4 = vector.load %arg4[%c0_3, %c0_4] : memref<8x1xf32, #tpu.memory_space<vmem>>, vector<8x1xf32>
    %c0_5 = arith.constant 0 : index
    %c0_6 = arith.constant 0 : index
    %5 = vector.load %arg2[%c0_5, %c0_6] : memref<8x1024xf32, #tpu.memory_space<vmem>>, vector<8x1024xf32>
    %6 = vector.broadcast %4 : vector<8x1xf32> to vector<8x1024xf32>
    %7 = arith.mulf %6, %5 : vector<8x1024xf32>
    %8 = arith.addf %3, %7 : vector<8x1024xf32>
    %9 = arith.truncf %8 : vector<8x1024xf32> to vector<8x1024xbf16>
    %c0_7 = arith.constant 0 : index
    %c0_8 = arith.constant 0 : index
    %10 = vector.load %arg7[%c0_7, %c0_8] : memref<1024x256xbf16, #tpu.memory_space<vmem>>, vector<1024x256xbf16>
    %cst = arith.constant dense<0.000000e+00> : vector<8x256xf32>
    %11 = tpu.matmul %9, %10, %cst {dimension_numbers = #tpu.dot_dimension_numbers<[1], [0], [0], [1], [0, 0, 1, 1], [], []>} : vector<8x1024xbf16>, vector<1024x256xbf16>, vector<8x256xf32> -> vector<8x256xf32>
    %c0_9 = arith.constant 0 : index
    %c0_10 = arith.constant 0 : index
    %12 = vector.load %arg5[%c0_9, %c0_10] : memref<8x256xf32, #tpu.memory_space<vmem>>, vector<8x256xf32>
    %13 = arith.addf %11, %12 : vector<8x256xf32>
    %c0_11 = arith.constant 0 : index
    %c0_12 = arith.constant 0 : index
    %14 = vector.load %arg6[%c0_11, %c0_12] : memref<8x1xf32, #tpu.memory_space<vmem>>, vector<8x1xf32>
    %c0_13 = arith.constant 0 : index
    %c0_14 = arith.constant 0 : index
    %15 = vector.load %arg8[%c0_13, %c0_14] : memref<1x256xf32, #tpu.memory_space<vmem>>, vector<1x256xf32>
    %16 = vector.broadcast %14 : vector<8x1xf32> to vector<8x256xf32>
    %17 = vector.broadcast %15 : vector<1x256xf32> to vector<8x256xf32>
    %18 = arith.mulf %16, %17 : vector<8x256xf32>
    %19 = arith.addf %13, %18 : vector<8x256xf32>
    %c0_15 = arith.constant 0 : index
    %c0_16 = arith.constant 0 : index
    %20 = vector.load %arg9[%c0_15, %c0_16] : memref<1x256xf32, #tpu.memory_space<vmem>>, vector<1x256xf32>
    %21 = vector.broadcast %20 : vector<1x256xf32> to vector<8x256xf32>
    %22 = arith.addf %19, %21 : vector<8x256xf32>
    %cst_17 = arith.constant 0.000000e+00 : f32
    %23 = vector.broadcast %cst_17 : f32 to vector<8x256xf32>
    %24 = arith.maximumf %22, %23 : vector<8x256xf32>
    %25 = arith.truncf %24 : vector<8x256xf32> to vector<8x256xbf16>
    %c0_18 = arith.constant 0 : index
    %c0_19 = arith.constant 0 : index
    %26 = vector.load %arg10[%c0_18, %c0_19] : memref<256x1024xbf16, #tpu.memory_space<vmem>>, vector<256x1024xbf16>
    %cst_20 = arith.constant dense<0.000000e+00> : vector<8x1024xf32>
    %27 = tpu.matmul %25, %26, %cst_20 {dimension_numbers = #tpu.dot_dimension_numbers<[1], [0], [0], [1], [0, 0, 1, 1], [], []>} : vector<8x256xbf16>, vector<256x1024xbf16>, vector<8x1024xf32> -> vector<8x1024xf32>
    %c0_21 = arith.constant 0 : index
    %c0_22 = arith.constant 0 : index
    %28 = vector.load %arg11[%c0_21, %c0_22] : memref<1x1024xf32, #tpu.memory_space<vmem>>, vector<1x1024xf32>
    %29 = vector.broadcast %28 : vector<1x1024xf32> to vector<8x1024xf32>
    %30 = arith.addf %27, %29 : vector<8x1024xf32>
    %c0_23 = arith.constant 0 : index
    %c0_24 = arith.constant 0 : index
    %31 = vector.load %arg2[%c0_23, %c0_24] : memref<8x1024xf32, #tpu.memory_space<vmem>>, vector<8x1024xf32>
    %32 = arith.subf %31, %30 : vector<8x1024xf32>
    %33 = arith.mulf %32, %32 : vector<8x1024xf32>
    %34 = vector.shape_cast %33 : vector<8x1024xf32> to vector<1x8x1024xf32>
    %cst_25 = arith.constant dense<0.000000e+00> : vector<1xf32>
    %35 = vector.multi_reduction <add>, %34, %cst_25 [1, 2] : vector<1x8x1024xf32> to vector<1xf32>
    %36 = vector.shape_cast %35 : vector<1xf32> to vector<1x1x1xf32>
    %37 = vector.extract %36[0, 0, 0] : f32 from vector<1x1x1xf32>
    %38 = vector.broadcast %37 : f32 to vector<1x8x128xf32>
    %c0_26 = arith.constant 0 : index
    %c0_27 = arith.constant 0 : index
    %c0_28 = arith.constant 0 : index
    %39 = vector.load %arg12[%c0_26, %c0_27, %c0_28] : memref<1x8x128xf32, #tpu.memory_space<vmem>>, vector<1x8x128xf32>
    tpu.vector_store %arg12[%c0_26, %c0_27, %c0_28], %38 {strides = array<i32>} : memref<1x8x128xf32, #tpu.memory_space<vmem>>, vector<1x8x128xf32>,
    return
  }
  func.func @transform_0(%arg0: i32) -> (i32, i32) {
    %c0_i32 = arith.constant 0 : i32
    %c0_i32_0 = arith.constant 0 : i32
    return %arg0, %c0_i32 : i32, i32
  }
  func.func @transform_1(%arg0: i32) -> (i32, i32) {
    %c0_i32 = arith.constant 0 : i32
    %c0_i32_0 = arith.constant 0 : i32
    return %arg0, %c0_i32 : i32, i32
  }
  func.func @transform_2(%arg0: i32) -> (i32, i32) {
    %c0_i32 = arith.constant 0 : i32
    %c0_i32_0 = arith.constant 0 : i32
    return %arg0, %c0_i32 : i32, i32
  }
  func.func @transform_3(%arg0: i32) -> (i32, i32) {
    %c0_i32 = arith.constant 0 : i32
    %c0_i32_0 = arith.constant 0 : i32
    return %arg0, %c0_i32 : i32, i32
  }
  func.func @transform_4(%arg0: i32) -> (i32, i32) {
    %c0_i32 = arith.constant 0 : i32
    %c0_i32_0 = arith.constant 0 : i32
    return %arg0, %c0_i32 : i32, i32
  }
  func.func @transform_5(%arg0: i32) -> (i32, i32) {
    %c0_i32 = arith.constant 0 : i32
    %c0_i32_0 = arith.constant 0 : i32
    return %arg0, %c0_i32 : i32, i32
  }
  func.func @transform_6(%arg0: i32) -> (i32, i32) {
    %c0_i32 = arith.constant 0 : i32
    %c0_i32_0 = arith.constant 0 : i32
    %c0_i32_1 = arith.constant 0 : i32
    return %c0_i32, %c0_i32_0 : i32, i32
  }
  func.func @transform_7(%arg0: i32) -> (i32, i32) {
    %c0_i32 = arith.constant 0 : i32
    %c0_i32_0 = arith.constant 0 : i32
    %c0_i32_1 = arith.constant 0 : i32
    return %c0_i32, %c0_i32_0 : i32, i32
  }
  func.func @transform_8(%arg0: i32) -> (i32, i32) {
    %c0_i32 = arith.constant 0 : i32
    %c0_i32_0 = arith.constant 0 : i32
    %c0_i32_1 = arith.constant 0 : i32
    return %c0_i32, %c0_i32_0 : i32, i32
  }
  func.func @transform_9(%arg0: i32) -> (i32, i32) {
    %c0_i32 = arith.constant 0 : i32
    %c0_i32_0 = arith.constant 0 : i32
    %c0_i32_1 = arith.constant 0 : i32
    return %c0_i32, %c0_i32_0 : i32, i32
  }
  func.func @transform_10(%arg0: i32) -> (i32, i32) {
    %c0_i32 = arith.constant 0 : i32
    %c0_i32_0 = arith.constant 0 : i32
    %c0_i32_1 = arith.constant 0 : i32
    return %c0_i32, %c0_i32_0 : i32, i32
  }
  func.func @transform_11(%arg0: i32) -> (i32, i32, i32) {
    %c0_i32 = arith.constant 0 : i32
    %c0_i32_0 = arith.constant 0 : i32
    %c0_i32_1 = arith.constant 0 : i32
    return %arg0, %c0_i32, %c0_i32_0 : i32, i32, i32
  }
}

</mosaic_0001>

<llo_original>
// kernel: ddpm_forward.3
$region0: #{ddpm_forward.3}
  #allocation0 [shape = 'u32[]', space=smem, size = 0x4, offset = 0x4, fixed_abs, tag = 'smem constant byte address 0x4 - core index']
  #allocation1 [shape = 'u32[144,128]{1,0:T(1,128)}', space=vmem, size = 0x12000, scoped, tag = 'internal scratch']
  %s0 = inlined_call_operand.vmem [shape: f32[8,1024], index: 0, kind: input, shape index: {}]
  %s1 = inlined_call_operand.vmem [shape: f32[8,1024], index: 1, kind: input, shape index: {}]
  %s2 = inlined_call_operand.vmem [shape: f32[8,1], index: 2, kind: input, shape index: {}]
  %s3 = inlined_call_operand.vmem [shape: f32[8,1], index: 3, kind: input, shape index: {}]
  %s4 = inlined_call_operand.vmem [shape: f32[8,256], index: 4, kind: input, shape index: {}]
  %s5 = inlined_call_operand.vmem [shape: f32[8,1], index: 5, kind: input, shape index: {}]
  %s6 = inlined_call_operand.vmem [shape: bf16[1024,256], index: 6, kind: input, shape index: {}]
  %s7 = inlined_call_operand.vmem [shape: f32[1,256], index: 7, kind: input, shape index: {}]
  %s8 = inlined_call_operand.vmem [shape: f32[1,256], index: 8, kind: input, shape index: {}]
  %s9 = inlined_call_operand.vmem [shape: bf16[256,1024], index: 9, kind: input, shape index: {}]
  %s10 = inlined_call_operand.vmem [shape: f32[1,1024], index: 10, kind: input, shape index: {}]
  %s11 = inlined_call_operand.vmem [shape: f32[1,8,128], index: 11, kind: output, shape index: {}]
  %s12 = sld [smem:[#allocation0]]
  $region54: #{ddpm_forward.3} parent=0
    _
  %s14 = ssub.s32 1, %s12
  %s15 = scalar_select 0, %s14, %s12
  // Predicated region
  $region2: #{ddpm_forward.3} parent=0 // pred_check
    _
  $region3: #{ddpm_forward.3} parent=0 // pred_check_branch
    %17 = sbr.rel (0) target = $region5
  $region4: #{ddpm_forward.3} parent=0 // pred_region
    _
  $region5: #{ddpm_forward.3} parent=0 // pred_fallthru
    _
  // Predicated region
  $region6: #{ddpm_forward.3} parent=0 // pred_check
    _
  $region7: #{ddpm_forward.3} parent=0 // pred_check_branch
    %19 = sbr.rel (0) target = $region9
  $region8: #{ddpm_forward.3} parent=0 // pred_region
    _
  $region9: #{ddpm_forward.3} parent=0 // pred_fallthru
    _
  // Predicated region
  $region10: #{ddpm_forward.3} parent=0 // pred_check
    _
  $region11: #{ddpm_forward.3} parent=0 // pred_check_branch
    %21 = sbr.rel (0) target = $region13
  $region12: #{ddpm_forward.3} parent=0 // pred_region
    _
  $region13: #{ddpm_forward.3} parent=0 // pred_fallthru
    _
  // Predicated region
  $region14: #{ddpm_forward.3} parent=0 // pred_check
    _
  $region15: #{ddpm_forward.3} parent=0 // pred_check_branch
    %23 = sbr.rel (0) target = $region17
  $region16: #{ddpm_forward.3} parent=0 // pred_region
    _
  $region17: #{ddpm_forward.3} parent=0 // pred_fallthru
    _
  // Predicated region
  $region18: #{ddpm_forward.3} parent=0 // pred_check
    _
  $region19: #{ddpm_forward.3} parent=0 // pred_check_branch
    %25 = sbr.rel (0) target = $region21
  $region20: #{ddpm_forward.3} parent=0 // pred_region
    _
  $region21: #{ddpm_forward.3} parent=0 // pred_fallthru
    _
  // Predicated region
  $region22: #{ddpm_forward.3} parent=0 // pred_check
    _
  $region23: #{ddpm_forward.3} parent=0 // pred_check_branch
    %27 = sbr.rel (0) target = $region25
  $region24: #{ddpm_forward.3} parent=0 // pred_region
    _
  $region25: #{ddpm_forward.3} parent=0 // pred_fallthru
    _
  // Predicated region
  $region26: #{ddpm_forward.3} parent=0 // pred_check
    _
  $region27: #{ddpm_forward.3} parent=0 // pred_check_branch
    %29 = sbr.rel (0) target = $region29
  $region28: #{ddpm_forward.3} parent=0 // pred_region
    _
  $region29: #{ddpm_forward.3} parent=0 // pred_fallthru
    _
  // Predicated region
  $region30: #{ddpm_forward.3} parent=0 // pred_check
    _
  $region31: #{ddpm_forward.3} parent=0 // pred_check_branch
    %31 = sbr.rel (0) target = $region33
  $region32: #{ddpm_forward.3} parent=0 // pred_region
    _
  $region33: #{ddpm_forward.3} parent=0 // pred_fallthru
    _
  // Predicated region
  $region34: #{ddpm_forward.3} parent=0 // pred_check
    _
  $region35: #{ddpm_forward.3} parent=0 // pred_check_branch
    %33 = sbr.rel (0) target = $region37
  $region36: #{ddpm_forward.3} parent=0 // pred_region
    _
  $region37: #{ddpm_forward.3} parent=0 // pred_fallthru
    _
  // Predicated region
  $region38: #{ddpm_forward.3} parent=0 // pred_check
    _
  $region39: #{ddpm_forward.3} parent=0 // pred_check_branch
    %35 = sbr.rel (0) target = $region41
  $region40: #{ddpm_forward.3} parent=0 // pred_region
    _
  $region41: #{ddpm_forward.3} parent=0 // pred_fallthru
    _
  // Predicated region
  $region42: #{ddpm_forward.3} parent=0 // pred_check
    _
  $region43: #{ddpm_forward.3} parent=0 // pred_check_branch
    %37 = sbr.rel (0) target = $region45
  $region44: #{ddpm_forward.3} parent=0 // pred_region
    _
  $region45: #{ddpm_forward.3} parent=0 // pred_fallthru
    _
  %v38 = vld [vmem:[%s2] sm:$0xff]
  %v39 = vld [vmem:[%s0] sm:$0xff]
  %v40 = vld [vmem:[%s0 + $0x8] sm:$0xff]
  %v41 = vld [vmem:[%s0 + $0x10] sm:$0xff]
  %v42 = vld [vmem:[%s0 + $0x18] sm:$0xff]
  %v43 = vld [vmem:[%s0 + $0x20] sm:$0xff]
  %v44 = vld [vmem:[%s0 + $0x28] sm:$0xff]
  %v45 = vld [vmem:[%s0 + $0x30] sm:$0xff]
  %v46 = vld [vmem:[%s0 + $0x38] sm:$0xff]
  %48 = vset.pattern.permute.xlu0 0
  %49 = vperm.xlu0 %48, %v38
  %v50 = vpop.permute.xlu0 %49
  %v52 = vmul.f32 %v50, %v39
  %v53 = vmul.f32 %v50, %v40
  %v54 = vmul.f32 %v50, %v41
  %v55 = vmul.f32 %v50, %v42
  %v56 = vmul.f32 %v50, %v43
  %v57 = vmul.f32 %v50, %v44
  %v58 = vmul.f32 %v50, %v45
  %v59 = vmul.f32 %v50, %v46
  %v60 = vld [vmem:[%s3] sm:$0xff]
  %v61 = vld [vmem:[%s1] sm:$0xff]
  %v62 = vld [vmem:[%s1 + $0x8] sm:$0xff]
  %v63 = vld [vmem:[%s1 + $0x10] sm:$0xff]
  %v64 = vld [vmem:[%s1 + $0x18] sm:$0xff]
  %v65 = vld [vmem:[%s1 + $0x20] sm:$0xff]
  %v66 = vld [vmem:[%s1 + $0x28] sm:$0xff]
  %v67 = vld [vmem:[%s1 + $0x30] sm:$0xff]
  %v68 = vld [vmem:[%s1 + $0x38] sm:$0xff]
  %70 = vset.pattern.permute.xlu0 0
  %71 = vperm.xlu0 %70, %v60
  %v72 = vpop.permute.xlu0 %71
  %v74 = vmul.f32 %v72, %v61
  %v75 = vmul.f32 %v72, %v62
  %v76 = vmul.f32 %v72, %v63
  %v77 = vmul.f32 %v72, %v64
  %v78 = vmul.f32 %v72, %v65
  %v79 = vmul.f32 %v72, %v66
  %v80 = vmul.f32 %v72, %v67
  %v81 = vmul.f32 %v72, %v68
  %v82 = vadd.f32 %v52, %v74
  %v83 = vadd.f32 %v53, %v75
  %v84 = vadd.f32 %v54, %v76
  %v85 = vadd.f32 %v55, %v77
  %v86 = vadd.f32 %v56, %v78
  %v87 = vadd.f32 %v57, %v79
  %v88 = vadd.f32 %v58, %v80
  %v89 = vadd.f32 %v59, %v81
  %v90 = vpack.c.bf16 %v82, %v82
  %v91 = vpack.c.bf16 %v83, %v83
  %v92 = vpack.c.bf16 %v84, %v84
  %v93 = vpack.c.bf16 %v85, %v85
  %v94 = vpack.c.bf16 %v86, %v86
  %v95 = vpack.c.bf16 %v87, %v87
  %v96 = vpack.c.bf16 %v88, %v88
  %v97 = vpack.c.bf16 %v89, %v89
  %v98 = vld [vmem:[%s6] sm:$0xff]
  %v99 = vld [vmem:[%s6 + $0x8] sm:$0xff]
  %v100 = vld [vmem:[%s6 + $0x10] sm:$0xff]
  %v101 = vld [vmem:[%s6 + $0x18] sm:$0xff]
  %v102 = vld [vmem:[%s6 + $0x20] sm:$0xff]
  %v103 = vld [vmem:[%s6 + $0x28] sm:$0xff]
  %v104 = vld [vmem:[%s6 + $0x30] sm:$0xff]
  %v105 = vld [vmem:[%s6 + $0x38] sm:$0xff]
  %v106 = vld [vmem:[%s6 + $0x40] sm:$0xff]
  %v107 = vld [vmem:[%s6 + $0x48] sm:$0xff]
  %v108 = vld [vmem:[%s6 + $0x50] sm:$0xff]
  %v109 = vld [vmem:[%s6 + $0x58] sm:$0xff]
  %v110 = vld [vmem:[%s6 + $0x60] sm:$0xff]
  %v111 = vld [vmem:[%s6 + $0x68] sm:$0xff]
  %v112 = vld [vmem:[%s6 + $0x70] sm:$0xff]
  %v113 = vld [vmem:[%s6 + $0x78] sm:$0xff]
  %v114 = vld [vmem:[%s6 + $0x80] sm:$0xff]
  %v115 = vld [vmem:[%s6 + $0x88] sm:$0xff]
  %v116 = vld [vmem:[%s6 + $0x90] sm:$0xff]
  %v117 = vld [vmem:[%s6 + $0x98] sm:$0xff]
  %v118 = vld [vmem:[%s6 + $0xa0] sm:$0xff]
  %v119 = vld [vmem:[%s6 + $0xa8] sm:$0xff]
  %v120 = vld [vmem:[%s6 + $0xb0] sm:$0xff]
  %v121 = vld [vmem:[%s6 + $0xb8] sm:$0xff]
  %v122 = vld [vmem:[%s6 + $0xc0] sm:$0xff]
  %v123 = vld [vmem:[%s6 + $0xc8] sm:$0xff]
  %v124 = vld [vmem:[%s6 + $0xd0] sm:$0xff]
  %v125 = vld [vmem:[%s6 + $0xd8] sm:$0xff]
  %v126 = vld [vmem:[%s6 + $0xe0] sm:$0xff]
  %v127 = vld [vmem:[%s6 + $0xe8] sm:$0xff]
  %v128 = vld [vmem:[%s6 + $0xf0] sm:$0xff]
  %v129 = vld [vmem:[%s6 + $0xf8] sm:$0xff]
  %v130 = vld [vmem:[%s6 + $0x100] sm:$0xff]
  %v131 = vld [vmem:[%s6 + $0x108] sm:$0xff]
  %v132 = vld [vmem:[%s6 + $0x110] sm:$0xff]
  %v133 = vld [vmem:[%s6 + $0x118] sm:$0xff]
  %v134 = vld [vmem:[%s6 + $0x120] sm:$0xff]
  %v135 = vld [vmem:[%s6 + $0x128] sm:$0xff]
  %v136 = vld [vmem:[%s6 + $0x130] sm:$0xff]
  %v137 = vld [vmem:[%s6 + $0x138] sm:$0xff]
  %v138 = vld [vmem:[%s6 + $0x140] sm:$0xff]
  %v139 = vld [vmem:[%s6 + $0x148] sm:$0xff]
  %v140 = vld [vmem:[%s6 + $0x150] sm:$0xff]
  %v141 = vld [vmem:[%s6 + $0x158] sm:$0xff]
  %v142 = vld [vmem:[%s6 + $0x160] sm:$0xff]
  %v143 = vld [vmem:[%s6 + $0x168] sm:$0xff]
  %v144 = vld [vmem:[%s6 + $0x170] sm:$0xff]
  %v145 = vld [vmem:[%s6 + $0x178] sm:$0xff]
  %v146 = vld [vmem:[%s6 + $0x180] sm:$0xff]
  %v147 = vld [vmem:[%s6 + $0x188] sm:$0xff]
  %v148 = vld [vmem:[%s6 + $0x190] sm:$0xff]
  %v149 = vld [vmem:[%s6 + $0x198] sm:$0xff]
  %v150 = vld [vmem:[%s6 + $0x1a0] sm:$0xff]
  %v151 = vld [vmem:[%s6 + $0x1a8] sm:$0xff]
  %v152 = vld [vmem:[%s6 + $0x1b0] sm:$0xff]
  %v153 = vld [vmem:[%s6 + $0x1b8] sm:$0xff]
  %v154 = vld [vmem:[%s6 + $0x1c0] sm:$0xff]
  %v155 = vld [vmem:[%s6 + $0x1c8] sm:$0xff]
  %v156 = vld [vmem:[%s6 + $0x1d0] sm:$0xff]
  %v157 = vld [vmem:[%s6 + $0x1d8] sm:$0xff]
  %v158 = vld [vmem:[%s6 + $0x1e0] sm:$0xff]
  %v159 = vld [vmem:[%s6 + $0x1e8] sm:$0xff]
  %v160 = vld [vmem:[%s6 + $0x1f0] sm:$0xff]
  %v161 = vld [vmem:[%s6 + $0x1f8] sm:$0xff]
  %v162 = vld [vmem:[%s6 + $0x200] sm:$0xff]
  %v163 = vld [vmem:[%s6 + $0x208] sm:$0xff]
  %v164 = vld [vmem:[%s6 + $0x210] sm:$0xff]
  %v165 = vld [vmem:[%s6 + $0x218] sm:$0xff]
  %v166 = vld [vmem:[%s6 + $0x220] sm:$0xff]
  %v167 = vld [vmem:[%s6 + $0x228] sm:$0xff]
  %v168 = vld [vmem:[%s6 + $0x230] sm:$0xff]
  %v169 = vld [vmem:[%s6 + $0x238] sm:$0xff]
  %v170 = vld [vmem:[%s6 + $0x240] sm:$0xff]
  %v171 = vld [vmem:[%s6 + $0x248] sm:$0xff]
  %v172 = vld [vmem:[%s6 + $0x250] sm:$0xff]
  %v173 = vld [vmem:[%s6 + $0x258] sm:$0xff]
  %v174 = vld [vmem:[%s6 + $0x260] sm:$0xff]
  %v175 = vld [vmem:[%s6 + $0x268] sm:$0xff]
  %v176 = vld [vmem:[%s6 + $0x270] sm:$0xff]
  %v177 = vld [vmem:[%s6 + $0x278] sm:$0xff]
  %v178 = vld [vmem:[%s6 + $0x280] sm:$0xff]
  %v179 = vld [vmem:[%s6 + $0x288] sm:$0xff]
  %v180 = vld [vmem:[%s6 + $0x290] sm:$0xff]
  %v181 = vld [vmem:[%s6 + $0x298] sm:$0xff]
  %v182 = vld [vmem:[%s6 + $0x2a0] sm:$0xff]
  %v183 = vld [vmem:[%s6 + $0x2a8] sm:$0xff]
  %v184 = vld [vmem:[%s6 + $0x2b0] sm:$0xff]
  %v185 = vld [vmem:[%s6 + $0x2b8] sm:$0xff]
  %v186 = vld [vmem:[%s6 + $0x2c0] sm:$0xff]
  %v187 = vld [vmem:[%s6 + $0x2c8] sm:$0xff]
  %v188 = vld [vmem:[%s6 + $0x2d0] sm:$0xff]
  %v189 = vld [vmem:[%s6 + $0x2d8] sm:$0xff]
  %v190 = vld [vmem:[%s6 + $0x2e0] sm:$0xff]
  %v191 = vld [vmem:[%s6 + $0x2e8] sm:$0xff]
  %v192 = vld [vmem:[%s6 + $0x2f0] sm:$0xff]
  %v193 = vld [vmem:[%s6 + $0x2f8] sm:$0xff]
  %v194 = vld [vmem:[%s6 + $0x300] sm:$0xff]
  %v195 = vld [vmem:[%s6 + $0x308] sm:$0xff]
  %v196 = vld [vmem:[%s6 + $0x310] sm:$0xff]
  %v197 = vld [vmem:[%s6 + $0x318] sm:$0xff]
  %v198 = vld [vmem:[%s6 + $0x320] sm:$0xff]
  %v199 = vld [vmem:[%s6 + $0x328] sm:$0xff]
  %v200 = vld [vmem:[%s6 + $0x330] sm:$0xff]
  %v201 = vld [vmem:[%s6 + $0x338] sm:$0xff]
  %v202 = vld [vmem:[%s6 + $0x340] sm:$0xff]
  %v203 = vld [vmem:[%s6 + $0x348] sm:$0xff]
  %v204 = vld [vmem:[%s6 + $0x350] sm:$0xff]
  %v205 = vld [vmem:[%s6 + $0x358] sm:$0xff]
  %v206 = vld [vmem:[%s6 + $0x360] sm:$0xff]
  %v207 = vld [vmem:[%s6 + $0x368] sm:$0xff]
  %v208 = vld [vmem:[%s6 + $0x370] sm:$0xff]
  %v209 = vld [vmem:[%s6 + $0x378] sm:$0xff]
  %v210 = vld [vmem:[%s6 + $0x380] sm:$0xff]
  %v211 = vld [vmem:[%s6 + $0x388] sm:$0xff]
  %v212 = vld [vmem:[%s6 + $0x390] sm:$0xff]
  %v213 = vld [vmem:[%s6 + $0x398] sm:$0xff]
  %v214 = vld [vmem:[%s6 + $0x3a0] sm:$0xff]
  %v215 = vld [vmem:[%s6 + $0x3a8] sm:$0xff]
  %v216 = vld [vmem:[%s6 + $0x3b0] sm:$0xff]
  %v217 = vld [vmem:[%s6 + $0x3b8] sm:$0xff]
  %v218 = vld [vmem:[%s6 + $0x3c0] sm:$0xff]
  %v219 = vld [vmem:[%s6 + $0x3c8] sm:$0xff]
  %v220 = vld [vmem:[%s6 + $0x3d0] sm:$0xff]
  %v221 = vld [vmem:[%s6 + $0x3d8] sm:$0xff]
  %v222 = vld [vmem:[%s6 + $0x3e0] sm:$0xff]
  %v223 = vld [vmem:[%s6 + $0x3e8] sm:$0xff]
  %v224 = vld [vmem:[%s6 + $0x3f0] sm:$0xff]
  %v225 = vld [vmem:[%s6 + $0x3f8] sm:$0xff]
  %v226 = vld [vmem:[%s4] sm:$0xff]
  %v227 = vld [vmem:[%s4 + $0x8] sm:$0xff]
  %v356 = vunpack.c.l.b16 %v98
  %v357 = vunpack.c.h.b16 %v98
  %v358 = vunpack.c.l.b16 %v99
  %v359 = vunpack.c.h.b16 %v99
  %v360 = vunpack.c.l.b16 %v100
  %v361 = vunpack.c.h.b16 %v100
  %v362 = vunpack.c.l.b16 %v101
  %v363 = vunpack.c.h.b16 %v101
  %v364 = vunpack.c.l.b16 %v102
  %v365 = vunpack.c.h.b16 %v102
  %v366 = vunpack.c.l.b16 %v103
  %v367 = vunpack.c.h.b16 %v103
  %v368 = vunpack.c.l.b16 %v104
  %v369 = vunpack.c.h.b16 %v104
  %v370 = vunpack.c.l.b16 %v105
  %v371 = vunpack.c.h.b16 %v105
  %v372 = vunpack.c.l.b16 %v106
  %v373 = vunpack.c.h.b16 %v106
  %v374 = vunpack.c.l.b16 %v107
  %v375 = vunpack.c.h.b16 %v107
  %v376 = vunpack.c.l.b16 %v108
  %v377 = vunpack.c.h.b16 %v108
  %v378 = vunpack.c.l.b16 %v109
  %v379 = vunpack.c.h.b16 %v109
  %v380 = vunpack.c.l.b16 %v110
  %v381 = vunpack.c.h.b16 %v110
  %v382 = vunpack.c.l.b16 %v111
  %v383 = vunpack.c.h.b16 %v111
  %v384 = vunpack.c.l.b16 %v112
  %v385 = vunpack.c.h.b16 %v112
  %v386 = vunpack.c.l.b16 %v113
  %v387 = vunpack.c.h.b16 %v113
  %v388 = vunpack.c.l.b16 %v114
  %v389 = vunpack.c.h.b16 %v114
  %v390 = vunpack.c.l.b16 %v115
  %v391 = vunpack.c.h.b16 %v115
  %v392 = vunpack.c.l.b16 %v116
  %v393 = vunpack.c.h.b16 %v116
  %v394 = vunpack.c.l.b16 %v117
  %v395 = vunpack.c.h.b16 %v117
  %v396 = vunpack.c.l.b16 %v118
  %v397 = vunpack.c.h.b16 %v118
  %v398 = vunpack.c.l.b16 %v119
  %v399 = vunpack.c.h.b16 %v119
  %v400 = vunpack.c.l.b16 %v120
  %v401 = vunpack.c.h.b16 %v120
  %v402 = vunpack.c.l.b16 %v121
  %v403 = vunpack.c.h.b16 %v121
  %v404 = vunpack.c.l.b16 %v122
  %v405 = vunpack.c.h.b16 %v122
  %v406 = vunpack.c.l.b16 %v123
  %v407 = vunpack.c.h.b16 %v123
  %v408 = vunpack.c.l.b16 %v124
  %v409 = vunpack.c.h.b16 %v124
  %v410 = vunpack.c.l.b16 %v125
  %v411 = vunpack.c.h.b16 %v125
  %v412 = vunpack.c.l.b16 %v126
  %v413 = vunpack.c.h.b16 %v126
  %v414 = vunpack.c.l.b16 %v127
  %v415 = vunpack.c.h.b16 %v127
  %v416 = vunpack.c.l.b16 %v128
  %v417 = vunpack.c.h.b16 %v128
  %v418 = vunpack.c.l.b16 %v129
  %v419 = vunpack.c.h.b16 %v129
  %v420 = vunpack.c.l.b16 %v130
  %v421 = vunpack.c.h.b16 %v130
  %v422 = vunpack.c.l.b16 %v131
  %v423 = vunpack.c.h.b16 %v131
  %v424 = vunpack.c.l.b16 %v132
  %v425 = vunpack.c.h.b16 %v132
  %v426 = vunpack.c.l.b16 %v133
  %v427 = vunpack.c.h.b16 %v133
  %v428 = vunpack.c.l.b16 %v134
  %v429 = vunpack.c.h.b16 %v134
  %v430 = vunpack.c.l.b16 %v135
  %v431 = vunpack.c.h.b16 %v135
  %v432 = vunpack.c.l.b16 %v136
  %v433 = vunpack.c.h.b16 %v136
  %v434 = vunpack.c.l.b16 %v137
  %v435 = vunpack.c.h.b16 %v137
  %v436 = vunpack.c.l.b16 %v138
  %v437 = vunpack.c.h.b16 %v138
  %v438 = vunpack.c.l.b16 %v139
  %v439 = vunpack.c.h.b16 %v139
  %v440 = vunpack.c.l.b16 %v140
  %v441 = vunpack.c.h.b16 %v140
  %v442 = vunpack.c.l.b16 %v141
  %v443 = vunpack.c.h.b16 %v141
  %v444 = vunpack.c.l.b16 %v142
  %v445 = vunpack.c.h.b16 %v142
  %v446 = vunpack.c.l.b16 %v143
  %v447 = vunpack.c.h.b16 %v143
  %v448 = vunpack.c.l.b16 %v144
  %v449 = vunpack.c.h.b16 %v144
  %v450 = vunpack.c.l.b16 %v145
  %v451 = vunpack.c.h.b16 %v145
  %v452 = vunpack.c.l.b16 %v146
  %v453 = vunpack.c.h.b16 %v146
  %v454 = vunpack.c.l.b16 %v147
  %v455 = vunpack.c.h.b16 %v147
  %v456 = vunpack.c.l.b16 %v148
  %v457 = vunpack.c.h.b16 %v148
  %v458 = vunpack.c.l.b16 %v149
  %v459 = vunpack.c.h.b16 %v149
  %v460 = vunpack.c.l.b16 %v150
  %v461 = vunpack.c.h.b16 %v150
  %v462 = vunpack.c.l.b16 %v151
  %v463 = vunpack.c.h.b16 %v151
  %v464 = vunpack.c.l.b16 %v152
  %v465 = vunpack.c.h.b16 %v152
  %v466 = vunpack.c.l.b16 %v153
  %v467 = vunpack.c.h.b16 %v153
  %v468 = vunpack.c.l.b16 %v154
  %v469 = vunpack.c.h.b16 %v154
  %v470 = vunpack.c.l.b16 %v155
  %v471 = vunpack.c.h.b16 %v155
  %v472 = vunpack.c.l.b16 %v156
  %v473 = vunpack.c.h.b16 %v156
  %v474 = vunpack.c.l.b16 %v157
  %v475 = vunpack.c.h.b16 %v157
  %v476 = vunpack.c.l.b16 %v158
  %v477 = vunpack.c.h.b16 %v158
  %v478 = vunpack.c.l.b16 %v159
  %v479 = vunpack.c.h.b16 %v159
  %v480 = vunpack.c.l.b16 %v160
  %v481 = vunpack.c.h.b16 %v160
  %v482 = vunpack.c.l.b16 %v161
  %v483 = vunpack.c.h.b16 %v161
  %v484 = vunpack.c.l.b16 %v162
  %v485 = vunpack.c.h.b16 %v162
  %v486 = vunpack.c.l.b16 %v163
  %v487 = vunpack.c.h.b16 %v163
  %v488 = vunpack.c.l.b16 %v164
  %v489 = vunpack.c.h.b16 %v164
  %v490 = vunpack.c.l.b16 %v165
  %v491 = vunpack.c.h.b16 %v165
  %v492 = vunpack.c.l.b16 %v166
  %v493 = vunpack.c.h.b16 %v166
  %v494 = vunpack.c.l.b16 %v167
  %v495 = vunpack.c.h.b16 %v167
  %v496 = vunpack.c.l.b16 %v168
  %v497 = vunpack.c.h.b16 %v168
  %v498 = vunpack.c.l.b16 %v169
  %v499 = vunpack.c.h.b16 %v169
  %v500 = vunpack.c.l.b16 %v170
  %v501 = vunpack.c.h.b16 %v170
  %v502 = vunpack.c.l.b16 %v171
  %v503 = vunpack.c.h.b16 %v171
  %v504 = vunpack.c.l.b16 %v172
  %v505 = vunpack.c.h.b16 %v172
  %v506 = vunpack.c.l.b16 %v173
  %v507 = vunpack.c.h.b16 %v173
  %v508 = vunpack.c.l.b16 %v174
  %v509 = vunpack.c.h.b16 %v174
  %v510 = vunpack.c.l.b16 %v175
  %v511 = vunpack.c.h.b16 %v175
  %v512 = vunpack.c.l.b16 %v176
  %v513 = vunpack.c.h.b16 %v176
  %v514 = vunpack.c.l.b16 %v177
  %v515 = vunpack.c.h.b16 %v177
  %v516 = vunpack.c.l.b16 %v178
  %v517 = vunpack.c.h.b16 %v178
  %v518 = vunpack.c.l.b16 %v179
  %v519 = vunpack.c.h.b16 %v179
  %v520 = vunpack.c.l.b16 %v180
  %v521 = vunpack.c.h.b16 %v180
  %v522 = vunpack.c.l.b16 %v181
  %v523 = vunpack.c.h.b16 %v181
  %v524 = vunpack.c.l.b16 %v182
  %v525 = vunpack.c.h.b16 %v182
  %v526 = vunpack.c.l.b16 %v183
  %v527 = vunpack.c.h.b16 %v183
  %v528 = vunpack.c.l.b16 %v184
  %v529 = vunpack.c.h.b16 %v184
  %v530 = vunpack.c.l.b16 %v185
  %v531 = vunpack.c.h.b16 %v185
  %v532 = vunpack.c.l.b16 %v186
  %v533 = vunpack.c.h.b16 %v186
  %v534 = vunpack.c.l.b16 %v187
  %v535 = vunpack.c.h.b16 %v187
  %v536 = vunpack.c.l.b16 %v188
  %v537 = vunpack.c.h.b16 %v188
  %v538 = vunpack.c.l.b16 %v189
  %v539 = vunpack.c.h.b16 %v189
  %v540 = vunpack.c.l.b16 %v190
  %v541 = vunpack.c.h.b16 %v190
  %v542 = vunpack.c.l.b16 %v191
  %v543 = vunpack.c.h.b16 %v191
  %v544 = vunpack.c.l.b16 %v192
  %v545 = vunpack.c.h.b16 %v192
  %v546 = vunpack.c.l.b16 %v193
  %v547 = vunpack.c.h.b16 %v193
  %v548 = vunpack.c.l.b16 %v194
  %v549 = vunpack.c.h.b16 %v194
  %v550 = vunpack.c.l.b16 %v195
  %v551 = vunpack.c.h.b16 %v195
  %v552 = vunpack.c.l.b16 %v196
  %v553 = vunpack.c.h.b16 %v196
  %v554 = vunpack.c.l.b16 %v197
  %v555 = vunpack.c.h.b16 %v197
  %v556 = vunpack.c.l.b16 %v198
  %v557 = vunpack.c.h.b16 %v198
  %v558 = vunpack.c.l.b16 %v199
  %v559 = vunpack.c.h.b16 %v199
  %v560 = vunpack.c.l.b16 %v200
  %v561 = vunpack.c.h.b16 %v200
  %v562 = vunpack.c.l.b16 %v201
  %v563 = vunpack.c.h.b16 %v201
  %v564 = vunpack.c.l.b16 %v202
  %v565 = vunpack.c.h.b16 %v202
  %v566 = vunpack.c.l.b16 %v203
  %v567 = vunpack.c.h.b16 %v203
  %v568 = vunpack.c.l.b16 %v204
  %v569 = vunpack.c.h.b16 %v204
  %v570 = vunpack.c.l.b16 %v205
  %v571 = vunpack.c.h.b16 %v205
  %v572 = vunpack.c.l.b16 %v206
  %v573 = vunpack.c.h.b16 %v206
  %v574 = vunpack.c.l.b16 %v207
  %v575 = vunpack.c.h.b16 %v207
  %v576 = vunpack.c.l.b16 %v208
  %v577 = vunpack.c.h.b16 %v208
  %v578 = vunpack.c.l.b16 %v209
  %v579 = vunpack.c.h.b16 %v209
  %v580 = vunpack.c.l.b16 %v210
  %v581 = vunpack.c.h.b16 %v210
  %v582 = vunpack.c.l.b16 %v211
  %v583 = vunpack.c.h.b16 %v211
  %v584 = vunpack.c.l.b16 %v212
  %v585 = vunpack.c.h.b16 %v212
  %v586 = vunpack.c.l.b16 %v213
  %v587 = vunpack.c.h.b16 %v213
  %v588 = vunpack.c.l.b16 %v214
  %v589 = vunpack.c.h.b16 %v214
  %v590 = vunpack.c.l.b16 %v215
  %v591 = vunpack.c.h.b16 %v215
  %v592 = vunpack.c.l.b16 %v216
  %v593 = vunpack.c.h.b16 %v216
  %v594 = vunpack.c.l.b16 %v217
  %v595 = vunpack.c.h.b16 %v217
  %v596 = vunpack.c.l.b16 %v218
  %v597 = vunpack.c.h.b16 %v218
  %v598 = vunpack.c.l.b16 %v219
  %v599 = vunpack.c.h.b16 %v219
  %v600 = vunpack.c.l.b16 %v220
  %v601 = vunpack.c.h.b16 %v220
  %v602 = vunpack.c.l.b16 %v221
  %v603 = vunpack.c.h.b16 %v221
  %v604 = vunpack.c.l.b16 %v222
  %v605 = vunpack.c.h.b16 %v222
  %v606 = vunpack.c.l.b16 %v223
  %v607 = vunpack.c.h.b16 %v223
  %v608 = vunpack.c.l.b16 %v224
  %v609 = vunpack.c.h.b16 %v224
  %v610 = vunpack.c.l.b16 %v225
  %v611 = vunpack.c.h.b16 %v225
  %v612 = vpack.c.b16 %v358, %v356
  %v613 = vpack.c.b16 %v359, %v357
  %v614 = vpack.c.b16 %v362, %v360
  %v615 = vpack.c.b16 %v363, %v361
  %v616 = vpack.c.b16 %v366, %v364
  %v617 = vpack.c.b16 %v367, %v365
  %v618 = vpack.c.b16 %v370, %v368
  %v619 = vpack.c.b16 %v371, %v369
  %v620 = vpack.c.b16 %v374, %v372
  %v621 = vpack.c.b16 %v375, %v373
  %v622 = vpack.c.b16 %v378, %v376
  %v623 = vpack.c.b16 %v379, %v377
  %v624 = vpack.c.b16 %v382, %v380
  %v625 = vpack.c.b16 %v383, %v381
  %v626 = vpack.c.b16 %v386, %v384
  %v627 = vpack.c.b16 %v387, %v385
  %v628 = vpack.c.b16 %v390, %v388
  %v629 = vpack.c.b16 %v391, %v389
  %v630 = vpack.c.b16 %v394, %v392
  %v631 = vpack.c.b16 %v395, %v393
  %v632 = vpack.c.b16 %v398, %v396
  %v633 = vpack.c.b16 %v399, %v397
  %v634 = vpack.c.b16 %v402, %v400
  %v635 = vpack.c.b16 %v403, %v401
  %v636 = vpack.c.b16 %v406, %v404
  %v637 = vpack.c.b16 %v407, %v405
  %v638 = vpack.c.b16 %v410, %v408
  %v639 = vpack.c.b16 %v411, %v409
  %v640 = vpack.c.b16 %v414, %v412
  %v641 = vpack.c.b16 %v415, %v413
  %v642 = vpack.c.b16 %v418, %v416
  %v643 = vpack.c.b16 %v419, %v417
  %v644 = vpack.c.b16 %v422, %v420
  %v645 = vpack.c.b16 %v423, %v421
  %v646 = vpack.c.b16 %v426, %v424
  %v647 = vpack.c.b16 %v427, %v425
  %v648 = vpack.c.b16 %v430, %v428
  %v649 = vpack.c.b16 %v431, %v429
  %v650 = vpack.c.b16 %v434, %v432
  %v651 = vpack.c.b16 %v435, %v433
  %v652 = vpack.c.b16 %v438, %v436
  %v653 = vpack.c.b16 %v439, %v437
  %v654 = vpack.c.b16 %v442, %v440
  %v655 = vpack.c.b16 %v443, %v441
  %v656 = vpack.c.b16 %v446, %v444
  %v657 = vpack.c.b16 %v447, %v445
  %v658 = vpack.c.b16 %v450, %v448
  %v659 = vpack.c.b16 %v451, %v449
  %v660 = vpack.c.b16 %v454, %v452
  %v661 = vpack.c.b16 %v455, %v453
  %v662 = vpack.c.b16 %v458, %v456
  %v663 = vpack.c.b16 %v459, %v457
  %v664 = vpack.c.b16 %v462, %v460
  %v665 = vpack.c.b16 %v463, %v461
  %v666 = vpack.c.b16 %v466, %v464
  %v667 = vpack.c.b16 %v467, %v465
  %v668 = vpack.c.b16 %v470, %v468
  %v669 = vpack.c.b16 %v471, %v469
  %v670 = vpack.c.b16 %v474, %v472
  %v671 = vpack.c.b16 %v475, %v473
  %v672 = vpack.c.b16 %v478, %v476
  %v673 = vpack.c.b16 %v479, %v477
  %v674 = vpack.c.b16 %v482, %v480
  %v675 = vpack.c.b16 %v483, %v481
  %v676 = vpack.c.b16 %v486, %v484
  %v677 = vpack.c.b16 %v487, %v485
  %v678 = vpack.c.b16 %v490, %v488
  %v679 = vpack.c.b16 %v491, %v489
  %v680 = vpack.c.b16 %v494, %v492
  %v681 = vpack.c.b16 %v495, %v493
  %v682 = vpack.c.b16 %v498, %v496
  %v683 = vpack.c.b16 %v499, %v497
  %v684 = vpack.c.b16 %v502, %v500
  %v685 = vpack.c.b16 %v503, %v501
  %v686 = vpack.c.b16 %v506, %v504
  %v687 = vpack.c.b16 %v507, %v505
  %v688 = vpack.c.b16 %v510, %v508
  %v689 = vpack.c.b16 %v511, %v509
  %v690 = vpack.c.b16 %v514, %v512
  %v691 = vpack.c.b16 %v515, %v513
  %v692 = vpack.c.b16 %v518, %v516
  %v693 = vpack.c.b16 %v519, %v517
  %v694 = vpack.c.b16 %v522, %v520
  %v695 = vpack.c.b16 %v523, %v521
  %v696 = vpack.c.b16 %v526, %v524
  %v697 = vpack.c.b16 %v527, %v525
  %v698 = vpack.c.b16 %v530, %v528
  %v699 = vpack.c.b16 %v531, %v529
  %v700 = vpack.c.b16 %v534, %v532
  %v701 = vpack.c.b16 %v535, %v533
  %v702 = vpack.c.b16 %v538, %v536
  %v703 = vpack.c.b16 %v539, %v537
  %v704 = vpack.c.b16 %v542, %v540
  %v705 = vpack.c.b16 %v543, %v541
  %v706 = vpack.c.b16 %v546, %v544
  %v707 = vpack.c.b16 %v547, %v545
  %v708 = vpack.c.b16 %v550, %v548
  %v709 = vpack.c.b16 %v551, %v549
  %v710 = vpack.c.b16 %v554, %v552
  %v711 = vpack.c.b16 %v555, %v553
  %v712 = vpack.c.b16 %v558, %v556
  %v713 = vpack.c.b16 %v559, %v557
  %v714 = vpack.c.b16 %v562, %v560
  %v715 = vpack.c.b16 %v563, %v561
  %v716 = vpack.c.b16 %v566, %v564
  %v717 = vpack.c.b16 %v567, %v565
  %v718 = vpack.c.b16 %v570, %v568
  %v719 = vpack.c.b16 %v571, %v569
  %v720 = vpack.c.b16 %v574, %v572
  %v721 = vpack.c.b16 %v575, %v573
  %v722 = vpack.c.b16 %v578, %v576
  %v723 = vpack.c.b16 %v579, %v577
  %v724 = vpack.c.b16 %v582, %v580
  %v725 = vpack.c.b16 %v583, %v581
  %v726 = vpack.c.b16 %v586, %v584
  %v727 = vpack.c.b16 %v587, %v585
  %v728 = vpack.c.b16 %v590, %v588
  %v729 = vpack.c.b16 %v591, %v589
  %v730 = vpack.c.b16 %v594, %v592
  %v731 = vpack.c.b16 %v595, %v593
  %v732 = vpack.c.b16 %v598, %v596
  %v733 = vpack.c.b16 %v599, %v597
  %v734 = vpack.c.b16 %v602, %v600
  %v735 = vpack.c.b16 %v603, %v601
  %v736 = vpack.c.b16 %v606, %v604
  %v737 = vpack.c.b16 %v607, %v605
  %v738 = vpack.c.b16 %v610, %v608
  %v739 = vpack.c.b16 %v611, %v609
  %868 = vmatprep.subr.bf16.mxu0 %v613
  %869 = vmatpush1.bf16.msra.mxu0 %v612
  %870 = vmatprep.subr.bf16.mxu0 %v615
  %871 = vmatpush1.bf16.msra.mxu0 %v614
  %872 = vmatprep.subr.bf16.mxu0 %v617
  %873 = vmatpush1.bf16.msra.mxu0 %v616
  %874 = vmatprep.subr.bf16.mxu0 %v619
  %875 = vmatpush1.bf16.msra.mxu0 %v618
  %876 = vmatprep.subr.bf16.mxu0 %v621
  %877 = vmatpush1.bf16.msra.mxu0 %v620
  %878 = vmatprep.subr.bf16.mxu0 %v623
  %879 = vmatpush1.bf16.msra.mxu0 %v622
  %880 = vmatprep.subr.bf16.mxu0 %v625
  %881 = vmatpush1.bf16.msra.mxu0 %v624
  %882 = vmatprep.subr.bf16.mxu0 %v627
  %883 = vmatpush1.bf16.msra.mxu0 %v626
  %884 = vmatprep.subr.bf16.mxu0 %v629
  %885 = vmatpush1.bf16.msra.mxu0 %v628
  %886 = vmatprep.subr.bf16.mxu0 %v631
  %887 = vmatpush1.bf16.msra.mxu0 %v630
  %888 = vmatprep.subr.bf16.mxu0 %v633
  %889 = vmatpush1.bf16.msra.mxu0 %v632
  %890 = vmatprep.subr.bf16.mxu0 %v635
  %891 = vmatpush1.bf16.msra.mxu0 %v634
  %892 = vmatprep.subr.bf16.mxu0 %v637
  %893 = vmatpush1.bf16.msra.mxu0 %v636
  %894 = vmatprep.subr.bf16.mxu0 %v639
  %895 = vmatpush1.bf16.msra.mxu0 %v638
  %896 = vmatprep.subr.bf16.mxu0 %v641
  %897 = vmatpush1.bf16.msra.mxu0 %v640
  %898 = vmatprep.subr.bf16.mxu0 %v643
  %899 = vmatpush1.bf16.msra.mxu0 %v642
  %900 = vmatprep.mubr.bf16.mxu0 %v91
  %901 = vmatmul.mubr.bf16.gmra.mrb[0].mxu0 %v90
  %v902 = vpop.f32.mrb[0].mxu0
  %v903 = vadd.f32 %v226, %v902
  %v904 = vpop.f32.mrb[0].mxu0
  %v905 = vadd.f32 %v227, %v904
  %v906 = vpop.f32.mrb[0].mxu0
  %v907 = vpop.f32.mrb[0].mxu0
  %908 = vdwg.mxu0
  %909 = vmatprep.subr.bf16.mxu0 %v645
  %910 = vmatpush1.bf16.msra.mxu0 %v644
  %911 = vmatprep.subr.bf16.mxu0 %v647
  %912 = vmatpush1.bf16.msra.mxu0 %v646
  %913 = vmatprep.subr.bf16.mxu0 %v649
  %914 = vmatpush1.bf16.msra.mxu0 %v648
  %915 = vmatprep.subr.bf16.mxu0 %v651
  %916 = vmatpush1.bf16.msra.mxu0 %v650
  %917 = vmatprep.subr.bf16.mxu0 %v653
  %918 = vmatpush1.bf16.msra.mxu0 %v652
  %919 = vmatprep.subr.bf16.mxu0 %v655
  %920 = vmatpush1.bf16.msra.mxu0 %v654
  %921 = vmatprep.subr.bf16.mxu0 %v657
  %922 = vmatpush1.bf16.msra.mxu0 %v656
  %923 = vmatprep.subr.bf16.mxu0 %v659
  %924 = vmatpush1.bf16.msra.mxu0 %v658
  %925 = vmatprep.subr.bf16.mxu0 %v661
  %926 = vmatpush1.bf16.msra.mxu0 %v660
  %927 = vmatprep.subr.bf16.mxu0 %v663
  %928 = vmatpush1.bf16.msra.mxu0 %v662
  %929 = vmatprep.subr.bf16.mxu0 %v665
  %930 = vmatpush1.bf16.msra.mxu0 %v664
  %931 = vmatprep.subr.bf16.mxu0 %v667
  %932 = vmatpush1.bf16.msra.mxu0 %v666
  %933 = vmatprep.subr.bf16.mxu0 %v669
  %934 = vmatpush1.bf16.msra.mxu0 %v668
  %935 = vmatprep.subr.bf16.mxu0 %v671
  %936 = vmatpush1.bf16.msra.mxu0 %v670
  %937 = vmatprep.subr.bf16.mxu0 %v673
  %938 = vmatpush1.bf16.msra.mxu0 %v672
  %939 = vmatprep.subr.bf16.mxu0 %v675
  %940 = vmatpush1.bf16.msra.mxu0 %v674
  %941 = vmatprep.mubr.bf16.mxu0 %v93
  %942 = vmatmul.mubr.bf16.gmra.mrb[0].mxu0 %v92
  %v943 = vpop.f32.mrb[0].mxu0
  %v944 = vadd.f32 %v903, %v943
  %v945 = vpop.f32.mrb[0].mxu0
  %v946 = vadd.f32 %v905, %v945
  %v947 = vpop.f32.mrb[0].mxu0
  %v948 = vpop.f32.mrb[0].mxu0
  %949 = vdwg.mxu0
  %950 = vmatprep.subr.bf16.mxu0 %v677
  %951 = vmatpush1.bf16.msra.mxu0 %v676
  %952 = vmatprep.subr.bf16.mxu0 %v679
  %953 = vmatpush1.bf16.msra.mxu0 %v678
  %954 = vmatprep.subr.bf16.mxu0 %v681
  %955 = vmatpush1.bf16.msra.mxu0 %v680
  %956 = vmatprep.subr.bf16.mxu0 %v683
  %957 = vmatpush1.bf16.msra.mxu0 %v682
  %958 = vmatprep.subr.bf16.mxu0 %v685
  %959 = vmatpush1.bf16.msra.mxu0 %v684
  %960 = vmatprep.subr.bf16.mxu0 %v687
  %961 = vmatpush1.bf16.msra.mxu0 %v686
  %962 = vmatprep.subr.bf16.mxu0 %v689
  %963 = vmatpush1.bf16.msra.mxu0 %v688
  %964 = vmatprep.subr.bf16.mxu0 %v691
  %965 = vmatpush1.bf16.msra.mxu0 %v690
  %966 = vmatprep.subr.bf16.mxu0 %v693
  %967 = vmatpush1.bf16.msra.mxu0 %v692
  %968 = vmatprep.subr.bf16.mxu0 %v695
  %969 = vmatpush1.bf16.msra.mxu0 %v694
  %970 = vmatprep.subr.bf16.mxu0 %v697
  %971 = vmatpush1.bf16.msra.mxu0 %v696
  %972 = vmatprep.subr.bf16.mxu0 %v699
  %973 = vmatpush1.bf16.msra.mxu0 %v698
  %974 = vmatprep.subr.bf16.mxu0 %v701
  %975 = vmatpush1.bf16.msra.mxu0 %v700
  %976 = vmatprep.subr.bf16.mxu0 %v703
  %977 = vmatpush1.bf16.msra.mxu0 %v702
  %978 = vmatprep.subr.bf16.mxu0 %v705
  %979 = vmatpush1.bf16.msra.mxu0 %v704
  %980 = vmatprep.subr.bf16.mxu0 %v707
  %981 = vmatpush1.bf16.msra.mxu0 %v706
  %982 = vmatprep.mubr.bf16.mxu0 %v95
  %983 = vmatmul.mubr.bf16.gmra.mrb[0].mxu0 %v94
  %v984 = vpop.f32.mrb[0].mxu0
  %v985 = vadd.f32 %v944, %v984
  %v986 = vpop.f32.mrb[0].mxu0
  %v987 = vadd.f32 %v946, %v986
  %v988 = vpop.f32.mrb[0].mxu0
  %v989 = vpop.f32.mrb[0].mxu0
  %990 = vdwg.mxu0
  %991 = vmatprep.subr.bf16.mxu0 %v709
  %992 = vmatpush1.bf16.msra.mxu0 %v708
  %993 = vmatprep.subr.bf16.mxu0 %v711
  %994 = vmatpush1.bf16.msra.mxu0 %v710
  %995 = vmatprep.subr.bf16.mxu0 %v713
  %996 = vmatpush1.bf16.msra.mxu0 %v712
  %997 = vmatprep.subr.bf16.mxu0 %v715
  %998 = vmatpush1.bf16.msra.mxu0 %v714
  %999 = vmatprep.subr.bf16.mxu0 %v717
  %1000 = vmatpush1.bf16.msra.mxu0 %v716
  %1001 = vmatprep.subr.bf16.mxu0 %v719
  %1002 = vmatpush1.bf16.msra.mxu0 %v718
  %1003 = vmatprep.subr.bf16.mxu0 %v721
  %1004 = vmatpush1.bf16.msra.mxu0 %v720
  %1005 = vmatprep.subr.bf16.mxu0 %v723
  %1006 = vmatpush1.bf16.msra.mxu0 %v722
  %1007 = vmatprep.subr.bf16.mxu0 %v725
  %1008 = vmatpush1.bf16.msra.mxu0 %v724
  %1009 = vmatprep.subr.bf16.mxu0 %v727
  %1010 = vmatpush1.bf16.msra.mxu0 %v726
  %1011 = vmatprep.subr.bf16.mxu0 %v729
  %1012 = vmatpush1.bf16.msra.mxu0 %v728
  %1013 = vmatprep.subr.bf16.mxu0 %v731
  %1014 = vmatpush1.bf16.msra.mxu0 %v730
  %1015 = vmatprep.subr.bf16.mxu0 %v733
  %1016 = vmatpush1.bf16.msra.mxu0 %v732
  %1017 = vmatprep.subr.bf16.mxu0 %v735
  %1018 = vmatpush1.bf16.msra.mxu0 %v734
  %1019 = vmatprep.subr.bf16.mxu0 %v737
  %1020 = vmatpush1.bf16.msra.mxu0 %v736
  %1021 = vmatprep.subr.bf16.mxu0 %v739
  %1022 = vmatpush1.bf16.msra.mxu0 %v738
  %1023 = vmatprep.mubr.bf16.mxu0 %v97
  %1024 = vmatmul.mubr.bf16.gmra.mrb[0].mxu0 %v96
  %v1025 = vpop.f32.mrb[0].mxu0
  %v1026 = vadd.f32 %v985, %v1025
  %v1027 = vpop.f32.mrb[0].mxu0
  %v1028 = vadd.f32 %v987, %v1027
  %v1029 = vpop.f32.mrb[0].mxu0
  %v1030 = vpop.f32.mrb[0].mxu0
  %1031 = vdwg.mxu0
  %v1032 = vld [vmem:[%s5] sm:$0xff]
  %v1033 = vld [vmem:[%s7] sm:$0x3]
  %1035 = vset.pattern.permute.xlu0 0
  %1036 = vperm.xlu0 %1035, %v1032
  %v1037 = vpop.permute.xlu0 %1036
  %v1040 = vlaneseq
  %v1041 = vshrl.u32 %v1040, 7
  %v1042 = vsub.s32 0, %v1041
  %v1043 = vrot.slane %v1033, %v1042
  %v1044 = vlaneseq
  %v1045 = vshrl.u32 %v1044, 7
  %v1046 = vsub.s32 1, %v1045
  %v1047 = vrot.slane %v1033, %v1046
  %v1050 = vmul.f32 %v1037, %v1043
  %v1051 = vmul.f32 %v1037, %v1047
  %v1052 = vadd.f32 %v1026, %v1050
  %v1053 = vadd.f32 %v1028, %v1051
  %v1054 = vld [vmem:[%s8] sm:$0x3]
  %v1056 = vlaneseq
  %v1057 = vshrl.u32 %v1056, 7
  %v1058 = vsub.s32 0, %v1057
  %v1059 = vrot.slane %v1054, %v1058
  %v1060 = vlaneseq
  %v1061 = vshrl.u32 %v1060, 7
  %v1062 = vsub.s32 1, %v1061
  %v1063 = vrot.slane %v1054, %v1062
  %v1066 = vadd.f32 %v1052, %v1059
  %v1067 = vadd.f32 %v1053, %v1063
  %v1068 = vmax.f32 %v1066, 0.0
  %v1069 = vmax.f32 %v1067, 0.0
  %v1070 = vpack.c.bf16 %v1068, %v1068
  %v1071 = vpack.c.bf16 %v1069, %v1069
  %v1072 = vld [vmem:[%s9] sm:$0xff]
  %v1073 = vld [vmem:[%s9 + $0x8] sm:$0xff]
  %v1074 = vld [vmem:[%s9 + $0x10] sm:$0xff]
  %v1075 = vld [vmem:[%s9 + $0x18] sm:$0xff]
  %v1076 = vld [vmem:[%s9 + $0x20] sm:$0xff]
  %v1077 = vld [vmem:[%s9 + $0x28] sm:$0xff]
  %v1078 = vld [vmem:[%s9 + $0x30] sm:$0xff]
  %v1079 = vld [vmem:[%s9 + $0x38] sm:$0xff]
  %v1080 = vld [vmem:[%s9 + $0x40] sm:$0xff]
  %v1081 = vld [vmem:[%s9 + $0x48] sm:$0xff]
  %v1082 = vld [vmem:[%s9 + $0x50] sm:$0xff]
  %v1083 = vld [vmem:[%s9 + $0x58] sm:$0xff]
  %v1084 = vld [vmem:[%s9 + $0x60] sm:$0xff]
  %v1085 = vld [vmem:[%s9 + $0x68] sm:$0xff]
  %v1086 = vld [vmem:[%s9 + $0x70] sm:$0xff]
  %v1087 = vld [vmem:[%s9 + $0x78] sm:$0xff]
  %v1088 = vld [vmem:[%s9 + $0x80] sm:$0xff]
  %v1089 = vld [vmem:[%s9 + $0x88] sm:$0xff]
  %v1090 = vld [vmem:[%s9 + $0x90] sm:$0xff]
  %v1091 = vld [vmem:[%s9 + $0x98] sm:$0xff]
  %v1092 = vld [vmem:[%s9 + $0xa0] sm:$0xff]
  %v1093 = vld [vmem:[%s9 + $0xa8] sm:$0xff]
  %v1094 = vld [vmem:[%s9 + $0xb0] sm:$0xff]
  %v1095 = vld [vmem:[%s9 + $0xb8] sm:$0xff]
  %v1096 = vld [vmem:[%s9 + $0xc0] sm:$0xff]
  %v1097 = vld [vmem:[%s9 + $0xc8] sm:$0xff]
  %v1098 = vld [vmem:[%s9 + $0xd0] sm:$0xff]
  %v1099 = vld [vmem:[%s9 + $0xd8] sm:$0xff]
  %v1100 = vld [vmem:[%s9 + $0xe0] sm:$0xff]
  %v1101 = vld [vmem:[%s9 + $0xe8] sm:$0xff]
  %v1102 = vld [vmem:[%s9 + $0xf0] sm:$0xff]
  %v1103 = vld [vmem:[%s9 + $0xf8] sm:$0xff]
  %v1104 = vld [vmem:[%s9 + $0x100] sm:$0xff]
  %v1105 = vld [vmem:[%s9 + $0x108] sm:$0xff]
  %v1106 = vld [vmem:[%s9 + $0x110] sm:$0xff]
  %v1107 = vld [vmem:[%s9 + $0x118] sm:$0xff]
  %v1108 = vld [vmem:[%s9 + $0x120] sm:$0xff]
  %v1109 = vld [vmem:[%s9 + $0x128] sm:$0xff]
  %v1110 = vld [vmem:[%s9 + $0x130] sm:$0xff]
  %v1111 = vld [vmem:[%s9 + $0x138] sm:$0xff]
  %v1112 = vld [vmem:[%s9 + $0x140] sm:$0xff]
  %v1113 = vld [vmem:[%s9 + $0x148] sm:$0xff]
  %v1114 = vld [vmem:[%s9 + $0x150] sm:$0xff]
  %v1115 = vld [vmem:[%s9 + $0x158] sm:$0xff]
  %v1116 = vld [vmem:[%s9 + $0x160] sm:$0xff]
  %v1117 = vld [vmem:[%s9 + $0x168] sm:$0xff]
  %v1118 = vld [vmem:[%s9 + $0x170] sm:$0xff]
  %v1119 = vld [vmem:[%s9 + $0x178] sm:$0xff]
  %v1120 = vld [vmem:[%s9 + $0x180] sm:$0xff]
  %v1121 = vld [vmem:[%s9 + $0x188] sm:$0xff]
  %v1122 = vld [vmem:[%s9 + $0x190] sm:$0xff]
  %v1123 = vld [vmem:[%s9 + $0x198] sm:$0xff]
  %v1124 = vld [vmem:[%s9 + $0x1a0] sm:$0xff]
  %v1125 = vld [vmem:[%s9 + $0x1a8] sm:$0xff]
  %v1126 = vld [vmem:[%s9 + $0x1b0] sm:$0xff]
  %v1127 = vld [vmem:[%s9 + $0x1b8] sm:$0xff]
  %v1128 = vld [vmem:[%s9 + $0x1c0] sm:$0xff]
  %v1129 = vld [vmem:[%s9 + $0x1c8] sm:$0xff]
  %v1130 = vld [vmem:[%s9 + $0x1d0] sm:$0xff]
  %v1131 = vld [vmem:[%s9 + $0x1d8] sm:$0xff]
  %v1132 = vld [vmem:[%s9 + $0x1e0] sm:$0xff]
  %v1133 = vld [vmem:[%s9 + $0x1e8] sm:$0xff]
  %v1134 = vld [vmem:[%s9 + $0x1f0] sm:$0xff]
  %v1135 = vld [vmem:[%s9 + $0x1f8] sm:$0xff]
  %v1136 = vld [vmem:[%s9 + $0x200] sm:$0xff]
  %v1137 = vld [vmem:[%s9 + $0x208] sm:$0xff]
  %v1138 = vld [vmem:[%s9 + $0x210] sm:$0xff]
  %v1139 = vld [vmem:[%s9 + $0x218] sm:$0xff]
  %v1140 = vld [vmem:[%s9 + $0x220] sm:$0xff]
  %v1141 = vld [vmem:[%s9 + $0x228] sm:$0xff]
  %v1142 = vld [vmem:[%s9 + $0x230] sm:$0xff]
  %v1143 = vld [vmem:[%s9 + $0x238] sm:$0xff]
  %v1144 = vld [vmem:[%s9 + $0x240] sm:$0xff]
  %v1145 = vld [vmem:[%s9 + $0x248] sm:$0xff]
  %v1146 = vld [vmem:[%s9 + $0x250] sm:$0xff]
  %v1147 = vld [vmem:[%s9 + $0x258] sm:$0xff]
  %v1148 = vld [vmem:[%s9 + $0x260] sm:$0xff]
  %v1149 = vld [vmem:[%s9 + $0x268] sm:$0xff]
  %v1150 = vld [vmem:[%s9 + $0x270] sm:$0xff]
  %v1151 = vld [vmem:[%s9 + $0x278] sm:$0xff]
  %v1152 = vld [vmem:[%s9 + $0x280] sm:$0xff]
  %v1153 = vld [vmem:[%s9 + $0x288] sm:$0xff]
  %v1154 = vld [vmem:[%s9 + $0x290] sm:$0xff]
  %v1155 = vld [vmem:[%s9 + $0x298] sm:$0xff]
  %v1156 = vld [vmem:[%s9 + $0x2a0] sm:$0xff]
  %v1157 = vld [vmem:[%s9 + $0x2a8] sm:$0xff]
  %v1158 = vld [vmem:[%s9 + $0x2b0] sm:$0xff]
  %v1159 = vld [vmem:[%s9 + $0x2b8] sm:$0xff]
  %v1160 = vld [vmem:[%s9 + $0x2c0] sm:$0xff]
  %v1161 = vld [vmem:[%s9 + $0x2c8] sm:$0xff]
  %v1162 = vld [vmem:[%s9 + $0x2d0] sm:$0xff]
  %v1163 = vld [vmem:[%s9 + $0x2d8] sm:$0xff]
  %v1164 = vld [vmem:[%s9 + $0x2e0] sm:$0xff]
  %v1165 = vld [vmem:[%s9 + $0x2e8] sm:$0xff]
  %v1166 = vld [vmem:[%s9 + $0x2f0] sm:$0xff]
  %v1167 = vld [vmem:[%s9 + $0x2f8] sm:$0xff]
  %v1168 = vld [vmem:[%s9 + $0x300] sm:$0xff]
  %v1169 = vld [vmem:[%s9 + $0x308] sm:$0xff]
  %v1170 = vld [vmem:[%s9 + $0x310] sm:$0xff]
  %v1171 = vld [vmem:[%s9 + $0x318] sm:$0xff]
  %v1172 = vld [vmem:[%s9 + $0x320] sm:$0xff]
  %v1173 = vld [vmem:[%s9 + $0x328] sm:$0xff]
  %v1174 = vld [vmem:[%s9 + $0x330] sm:$0xff]
  %v1175 = vld [vmem:[%s9 + $0x338] sm:$0xff]
  %v1176 = vld [vmem:[%s9 + $0x340] sm:$0xff]
  %v1177 = vld [vmem:[%s9 + $0x348] sm:$0xff]
  %v1178 = vld [vmem:[%s9 + $0x350] sm:$0xff]
  %v1179 = vld [vmem:[%s9 + $0x358] sm:$0xff]
  %v1180 = vld [vmem:[%s9 + $0x360] sm:$0xff]
  %v1181 = vld [vmem:[%s9 + $0x368] sm:$0xff]
  %v1182 = vld [vmem:[%s9 + $0x370] sm:$0xff]
  %v1183 = vld [vmem:[%s9 + $0x378] sm:$0xff]
  %v1184 = vld [vmem:[%s9 + $0x380] sm:$0xff]
  %v1185 = vld [vmem:[%s9 + $0x388] sm:$0xff]
  %v1186 = vld [vmem:[%s9 + $0x390] sm:$0xff]
  %v1187 = vld [vmem:[%s9 + $0x398] sm:$0xff]
  %v1188 = vld [vmem:[%s9 + $0x3a0] sm:$0xff]
  %v1189 = vld [vmem:[%s9 + $0x3a8] sm:$0xff]
  %v1190 = vld [vmem:[%s9 + $0x3b0] sm:$0xff]
  %v1191 = vld [vmem:[%s9 + $0x3b8] sm:$0xff]
  %v1192 = vld [vmem:[%s9 + $0x3c0] sm:$0xff]
  %v1193 = vld [vmem:[%s9 + $0x3c8] sm:$0xff]
  %v1194 = vld [vmem:[%s9 + $0x3d0] sm:$0xff]
  %v1195 = vld [vmem:[%s9 + $0x3d8] sm:$0xff]
  %v1196 = vld [vmem:[%s9 + $0x3e0] sm:$0xff]
  %v1197 = vld [vmem:[%s9 + $0x3e8] sm:$0xff]
  %v1198 = vld [vmem:[%s9 + $0x3f0] sm:$0xff]
  %v1199 = vld [vmem:[%s9 + $0x3f8] sm:$0xff]
  %v1200 = vld [vmem:[%s10] sm:$0xff]
  %v1202 = vlaneseq
  %v1203 = vshrl.u32 %v1202, 7
  %v1204 = vsub.s32 0, %v1203
  %v1205 = vrot.slane %v1200, %v1204
  %v1206 = vlaneseq
  %v1207 = vshrl.u32 %v1206, 7
  %v1208 = vsub.s32 1, %v1207
  %v1209 = vrot.slane %v1200, %v1208
  %v1210 = vlaneseq
  %v1211 = vshrl.u32 %v1210, 7
  %v1212 = vsub.s32 2, %v1211
  %v1213 = vrot.slane %v1200, %v1212
  %v1214 = vlaneseq
  %v1215 = vshrl.u32 %v1214, 7
  %v1216 = vsub.s32 3, %v1215
  %v1217 = vrot.slane %v1200, %v1216
  %v1218 = vlaneseq
  %v1219 = vshrl.u32 %v1218, 7
  %v1220 = vsub.s32 4, %v1219
  %v1221 = vrot.slane %v1200, %v1220
  %v1222 = vlaneseq
  %v1223 = vshrl.u32 %v1222, 7
  %v1224 = vsub.s32 5, %v1223
  %v1225 = vrot.slane %v1200, %v1224
  %v1226 = vlaneseq
  %v1227 = vshrl.u32 %v1226, 7
  %v1228 = vsub.s32 6, %v1227
  %v1229 = vrot.slane %v1200, %v1228
  %v1230 = vlaneseq
  %v1231 = vshrl.u32 %v1230, 7
  %v1232 = vsub.s32 7, %v1231
  %v1233 = vrot.slane %v1200, %v1232
  %v1370 = vunpack.c.l.b16 %v1072
  %v1371 = vunpack.c.h.b16 %v1072
  %v1372 = vunpack.c.l.b16 %v1073
  %v1373 = vunpack.c.h.b16 %v1073
  %v1374 = vunpack.c.l.b16 %v1074
  %v1375 = vunpack.c.h.b16 %v1074
  %v1376 = vunpack.c.l.b16 %v1075
  %v1377 = vunpack.c.h.b16 %v1075
  %v1378 = vunpack.c.l.b16 %v1076
  %v1379 = vunpack.c.h.b16 %v1076
  %v1380 = vunpack.c.l.b16 %v1077
  %v1381 = vunpack.c.h.b16 %v1077
  %v1382 = vunpack.c.l.b16 %v1078
  %v1383 = vunpack.c.h.b16 %v1078
  %v1384 = vunpack.c.l.b16 %v1079
  %v1385 = vunpack.c.h.b16 %v1079
  %v1386 = vunpack.c.l.b16 %v1080
  %v1387 = vunpack.c.h.b16 %v1080
  %v1388 = vunpack.c.l.b16 %v1081
  %v1389 = vunpack.c.h.b16 %v1081
  %v1390 = vunpack.c.l.b16 %v1082
  %v1391 = vunpack.c.h.b16 %v1082
  %v1392 = vunpack.c.l.b16 %v1083
  %v1393 = vunpack.c.h.b16 %v1083
  %v1394 = vunpack.c.l.b16 %v1084
  %v1395 = vunpack.c.h.b16 %v1084
  %v1396 = vunpack.c.l.b16 %v1085
  %v1397 = vunpack.c.h.b16 %v1085
  %v1398 = vunpack.c.l.b16 %v1086
  %v1399 = vunpack.c.h.b16 %v1086
  %v1400 = vunpack.c.l.b16 %v1087
  %v1401 = vunpack.c.h.b16 %v1087
  %v1402 = vunpack.c.l.b16 %v1088
  %v1403 = vunpack.c.h.b16 %v1088
  %v1404 = vunpack.c.l.b16 %v1089
  %v1405 = vunpack.c.h.b16 %v1089
  %v1406 = vunpack.c.l.b16 %v1090
  %v1407 = vunpack.c.h.b16 %v1090
  %v1408 = vunpack.c.l.b16 %v1091
  %v1409 = vunpack.c.h.b16 %v1091
  %v1410 = vunpack.c.l.b16 %v1092
  %v1411 = vunpack.c.h.b16 %v1092
  %v1412 = vunpack.c.l.b16 %v1093
  %v1413 = vunpack.c.h.b16 %v1093
  %v1414 = vunpack.c.l.b16 %v1094
  %v1415 = vunpack.c.h.b16 %v1094
  %v1416 = vunpack.c.l.b16 %v1095
  %v1417 = vunpack.c.h.b16 %v1095
  %v1418 = vunpack.c.l.b16 %v1096
  %v1419 = vunpack.c.h.b16 %v1096
  %v1420 = vunpack.c.l.b16 %v1097
  %v1421 = vunpack.c.h.b16 %v1097
  %v1422 = vunpack.c.l.b16 %v1098
  %v1423 = vunpack.c.h.b16 %v1098
  %v1424 = vunpack.c.l.b16 %v1099
  %v1425 = vunpack.c.h.b16 %v1099
  %v1426 = vunpack.c.l.b16 %v1100
  %v1427 = vunpack.c.h.b16 %v1100
  %v1428 = vunpack.c.l.b16 %v1101
  %v1429 = vunpack.c.h.b16 %v1101
  %v1430 = vunpack.c.l.b16 %v1102
  %v1431 = vunpack.c.h.b16 %v1102
  %v1432 = vunpack.c.l.b16 %v1103
  %v1433 = vunpack.c.h.b16 %v1103
  %v1434 = vunpack.c.l.b16 %v1104
  %v1435 = vunpack.c.h.b16 %v1104
  %v1436 = vunpack.c.l.b16 %v1105
  %v1437 = vunpack.c.h.b16 %v1105
  %v1438 = vunpack.c.l.b16 %v1106
  %v1439 = vunpack.c.h.b16 %v1106
  %v1440 = vunpack.c.l.b16 %v1107
  %v1441 = vunpack.c.h.b16 %v1107
  %v1442 = vunpack.c.l.b16 %v1108
  %v1443 = vunpack.c.h.b16 %v1108
  %v1444 = vunpack.c.l.b16 %v1109
  %v1445 = vunpack.c.h.b16 %v1109
  %v1446 = vunpack.c.l.b16 %v1110
  %v1447 = vunpack.c.h.b16 %v1110
  %v1448 = vunpack.c.l.b16 %v1111
  %v1449 = vunpack.c.h.b16 %v1111
  %v1450 = vunpack.c.l.b16 %v1112
  %v1451 = vunpack.c.h.b16 %v1112
  %v1452 = vunpack.c.l.b16 %v1113
  %v1453 = vunpack.c.h.b16 %v1113
  %v1454 = vunpack.c.l.b16 %v1114
  %v1455 = vunpack.c.h.b16 %v1114
  %v1456 = vunpack.c.l.b16 %v1115
  %v1457 = vunpack.c.h.b16 %v1115
  %v1458 = vunpack.c.l.b16 %v1116
  %v1459 = vunpack.c.h.b16 %v1116
  %v1460 = vunpack.c.l.b16 %v1117
  %v1461 = vunpack.c.h.b16 %v1117
  %v1462 = vunpack.c.l.b16 %v1118
  %v1463 = vunpack.c.h.b16 %v1118
  %v1464 = vunpack.c.l.b16 %v1119
  %v1465 = vunpack.c.h.b16 %v1119
  %v1466 = vunpack.c.l.b16 %v1120
  %v1467 = vunpack.c.h.b16 %v1120
  %v1468 = vunpack.c.l.b16 %v1121
  %v1469 = vunpack.c.h.b16 %v1121
  %v1470 = vunpack.c.l.b16 %v1122
  %v1471 = vunpack.c.h.b16 %v1122
  %v1472 = vunpack.c.l.b16 %v1123
  %v1473 = vunpack.c.h.b16 %v1123
  %v1474 = vunpack.c.l.b16 %v1124
  %v1475 = vunpack.c.h.b16 %v1124
  %v1476 = vunpack.c.l.b16 %v1125
  %v1477 = vunpack.c.h.b16 %v1125
  %v1478 = vunpack.c.l.b16 %v1126
  %v1479 = vunpack.c.h.b16 %v1126
  %v1480 = vunpack.c.l.b16 %v1127
  %v1481 = vunpack.c.h.b16 %v1127
  %v1482 = vunpack.c.l.b16 %v1128
  %v1483 = vunpack.c.h.b16 %v1128
  %v1484 = vunpack.c.l.b16 %v1129
  %v1485 = vunpack.c.h.b16 %v1129
  %v1486 = vunpack.c.l.b16 %v1130
  %v1487 = vunpack.c.h.b16 %v1130
  %v1488 = vunpack.c.l.b16 %v1131
  %v1489 = vunpack.c.h.b16 %v1131
  %v1490 = vunpack.c.l.b16 %v1132
  %v1491 = vunpack.c.h.b16 %v1132
  %v1492 = vunpack.c.l.b16 %v1133
  %v1493 = vunpack.c.h.b16 %v1133
  %v1494 = vunpack.c.l.b16 %v1134
  %v1495 = vunpack.c.h.b16 %v1134
  %v1496 = vunpack.c.l.b16 %v1135
  %v1497 = vunpack.c.h.b16 %v1135
  %v1498 = vunpack.c.l.b16 %v1136
  %v1499 = vunpack.c.h.b16 %v1136
  %v1500 = vunpack.c.l.b16 %v1137
  %v1501 = vunpack.c.h.b16 %v1137
  %v1502 = vunpack.c.l.b16 %v1138
  %v1503 = vunpack.c.h.b16 %v1138
  %v1504 = vunpack.c.l.b16 %v1139
  %v1505 = vunpack.c.h.b16 %v1139
  %v1506 = vunpack.c.l.b16 %v1140
  %v1507 = vunpack.c.h.b16 %v1140
  %v1508 = vunpack.c.l.b16 %v1141
  %v1509 = vunpack.c.h.b16 %v1141
  %v1510 = vunpack.c.l.b16 %v1142
  %v1511 = vunpack.c.h.b16 %v1142
  %v1512 = vunpack.c.l.b16 %v1143
  %v1513 = vunpack.c.h.b16 %v1143
  %v1514 = vunpack.c.l.b16 %v1144
  %v1515 = vunpack.c.h.b16 %v1144
  %v1516 = vunpack.c.l.b16 %v1145
  %v1517 = vunpack.c.h.b16 %v1145
  %v1518 = vunpack.c.l.b16 %v1146
  %v1519 = vunpack.c.h.b16 %v1146
  %v1520 = vunpack.c.l.b16 %v1147
  %v1521 = vunpack.c.h.b16 %v1147
  %v1522 = vunpack.c.l.b16 %v1148
  %v1523 = vunpack.c.h.b16 %v1148
  %v1524 = vunpack.c.l.b16 %v1149
  %v1525 = vunpack.c.h.b16 %v1149
  %v1526 = vunpack.c.l.b16 %v1150
  %v1527 = vunpack.c.h.b16 %v1150
  %v1528 = vunpack.c.l.b16 %v1151
  %v1529 = vunpack.c.h.b16 %v1151
  %v1530 = vunpack.c.l.b16 %v1152
  %v1531 = vunpack.c.h.b16 %v1152
  %v1532 = vunpack.c.l.b16 %v1153
  %v1533 = vunpack.c.h.b16 %v1153
  %v1534 = vunpack.c.l.b16 %v1154
  %v1535 = vunpack.c.h.b16 %v1154
  %v1536 = vunpack.c.l.b16 %v1155
  %v1537 = vunpack.c.h.b16 %v1155
  %v1538 = vunpack.c.l.b16 %v1156
  %v1539 = vunpack.c.h.b16 %v1156
  %v1540 = vunpack.c.l.b16 %v1157
  %v1541 = vunpack.c.h.b16 %v1157
  %v1542 = vunpack.c.l.b16 %v1158
  %v1543 = vunpack.c.h.b16 %v1158
  %v1544 = vunpack.c.l.b16 %v1159
  %v1545 = vunpack.c.h.b16 %v1159
  %v1546 = vunpack.c.l.b16 %v1160
  %v1547 = vunpack.c.h.b16 %v1160
  %v1548 = vunpack.c.l.b16 %v1161
  %v1549 = vunpack.c.h.b16 %v1161
  %v1550 = vunpack.c.l.b16 %v1162
  %v1551 = vunpack.c.h.b16 %v1162
  %v1552 = vunpack.c.l.b16 %v1163
  %v1553 = vunpack.c.h.b16 %v1163
  %v1554 = vunpack.c.l.b16 %v1164
  %v1555 = vunpack.c.h.b16 %v1164
  %v1556 = vunpack.c.l.b16 %v1165
  %v1557 = vunpack.c.h.b16 %v1165
  %v1558 = vunpack.c.l.b16 %v1166
  %v1559 = vunpack.c.h.b16 %v1166
  %v1560 = vunpack.c.l.b16 %v1167
  %v1561 = vunpack.c.h.b16 %v1167
  %v1562 = vunpack.c.l.b16 %v1168
  %v1563 = vunpack.c.h.b16 %v1168
  %v1564 = vunpack.c.l.b16 %v1169
  %v1565 = vunpack.c.h.b16 %v1169
  %v1566 = vunpack.c.l.b16 %v1170
  %v1567 = vunpack.c.h.b16 %v1170
  %v1568 = vunpack.c.l.b16 %v1171
  %v1569 = vunpack.c.h.b16 %v1171
  %v1570 = vunpack.c.l.b16 %v1172
  %v1571 = vunpack.c.h.b16 %v1172
  %v1572 = vunpack.c.l.b16 %v1173
  %v1573 = vunpack.c.h.b16 %v1173
  %v1574 = vunpack.c.l.b16 %v1174
  %v1575 = vunpack.c.h.b16 %v1174
  %v1576 = vunpack.c.l.b16 %v1175
  %v1577 = vunpack.c.h.b16 %v1175
  %v1578 = vunpack.c.l.b16 %v1176
  %v1579 = vunpack.c.h.b16 %v1176
  %v1580 = vunpack.c.l.b16 %v1177
  %v1581 = vunpack.c.h.b16 %v1177
  %v1582 = vunpack.c.l.b16 %v1178
  %v1583 = vunpack.c.h.b16 %v1178
  %v1584 = vunpack.c.l.b16 %v1179
  %v1585 = vunpack.c.h.b16 %v1179
  %v1586 = vunpack.c.l.b16 %v1180
  %v1587 = vunpack.c.h.b16 %v1180
  %v1588 = vunpack.c.l.b16 %v1181
  %v1589 = vunpack.c.h.b16 %v1181
  %v1590 = vunpack.c.l.b16 %v1182
  %v1591 = vunpack.c.h.b16 %v1182
  %v1592 = vunpack.c.l.b16 %v1183
  %v1593 = vunpack.c.h.b16 %v1183
  %v1594 = vunpack.c.l.b16 %v1184
  %v1595 = vunpack.c.h.b16 %v1184
  %v1596 = vunpack.c.l.b16 %v1185
  %v1597 = vunpack.c.h.b16 %v1185
  %v1598 = vunpack.c.l.b16 %v1186
  %v1599 = vunpack.c.h.b16 %v1186
  %v1600 = vunpack.c.l.b16 %v1187
  %v1601 = vunpack.c.h.b16 %v1187
  %v1602 = vunpack.c.l.b16 %v1188
  %v1603 = vunpack.c.h.b16 %v1188
  %v1604 = vunpack.c.l.b16 %v1189
  %v1605 = vunpack.c.h.b16 %v1189
  %v1606 = vunpack.c.l.b16 %v1190
  %v1607 = vunpack.c.h.b16 %v1190
  %v1608 = vunpack.c.l.b16 %v1191
  %v1609 = vunpack.c.h.b16 %v1191
  %v1610 = vunpack.c.l.b16 %v1192
  %v1611 = vunpack.c.h.b16 %v1192
  %v1612 = vunpack.c.l.b16 %v1193
  %v1613 = vunpack.c.h.b16 %v1193
  %v1614 = vunpack.c.l.b16 %v1194
  %v1615 = vunpack.c.h.b16 %v1194
  %v1616 = vunpack.c.l.b16 %v1195
  %v1617 = vunpack.c.h.b16 %v1195
  %v1618 = vunpack.c.l.b16 %v1196
  %v1619 = vunpack.c.h.b16 %v1196
  %v1620 = vunpack.c.l.b16 %v1197
  %v1621 = vunpack.c.h.b16 %v1197
  %v1622 = vunpack.c.l.b16 %v1198
  %v1623 = vunpack.c.h.b16 %v1198
  %v1624 = vunpack.c.l.b16 %v1199
  %v1625 = vunpack.c.h.b16 %v1199
  %v1626 = vpack.c.b16 %v1378, %v1370
  %v1627 = vpack.c.b16 %v1379, %v1371
  %v1628 = vpack.c.b16 %v1380, %v1372
  %v1629 = vpack.c.b16 %v1381, %v1373
  %v1630 = vpack.c.b16 %v1382, %v1374
  %v1631 = vpack.c.b16 %v1383, %v1375
  %v1632 = vpack.c.b16 %v1384, %v1376
  %v1633 = vpack.c.b16 %v1385, %v1377
  %v1634 = vpack.c.b16 %v1394, %v1386
  %v1635 = vpack.c.b16 %v1395, %v1387
  %v1636 = vpack.c.b16 %v1396, %v1388
  %v1637 = vpack.c.b16 %v1397, %v1389
  %v1638 = vpack.c.b16 %v1398, %v1390
  %v1639 = vpack.c.b16 %v1399, %v1391
  %v1640 = vpack.c.b16 %v1400, %v1392
  %v1641 = vpack.c.b16 %v1401, %v1393
  %v1642 = vpack.c.b16 %v1410, %v1402
  %v1643 = vpack.c.b16 %v1411, %v1403
  %v1644 = vpack.c.b16 %v1412, %v1404
  %v1645 = vpack.c.b16 %v1413, %v1405
  %v1646 = vpack.c.b16 %v1414, %v1406
  %v1647 = vpack.c.b16 %v1415, %v1407
  %v1648 = vpack.c.b16 %v1416, %v1408
  %v1649 = vpack.c.b16 %v1417, %v1409
  %v1650 = vpack.c.b16 %v1426, %v1418
  %v1651 = vpack.c.b16 %v1427, %v1419
  %v1652 = vpack.c.b16 %v1428, %v1420
  %v1653 = vpack.c.b16 %v1429, %v1421
  %v1654 = vpack.c.b16 %v1430, %v1422
  %v1655 = vpack.c.b16 %v1431, %v1423
  %v1656 = vpack.c.b16 %v1432, %v1424
  %v1657 = vpack.c.b16 %v1433, %v1425
  %v1658 = vpack.c.b16 %v1442, %v1434
  %v1659 = vpack.c.b16 %v1443, %v1435
  %v1660 = vpack.c.b16 %v1444, %v1436
  %v1661 = vpack.c.b16 %v1445, %v1437
  %v1662 = vpack.c.b16 %v1446, %v1438
  %v1663 = vpack.c.b16 %v1447, %v1439
  %v1664 = vpack.c.b16 %v1448, %v1440
  %v1665 = vpack.c.b16 %v1449, %v1441
  %v1666 = vpack.c.b16 %v1458, %v1450
  %v1667 = vpack.c.b16 %v1459, %v1451
  %v1668 = vpack.c.b16 %v1460, %v1452
  %v1669 = vpack.c.b16 %v1461, %v1453
  %v1670 = vpack.c.b16 %v1462, %v1454
  %v1671 = vpack.c.b16 %v1463, %v1455
  %v1672 = vpack.c.b16 %v1464, %v1456
  %v1673 = vpack.c.b16 %v1465, %v1457
  %v1674 = vpack.c.b16 %v1474, %v1466
  %v1675 = vpack.c.b16 %v1475, %v1467
  %v1676 = vpack.c.b16 %v1476, %v1468
  %v1677 = vpack.c.b16 %v1477, %v1469
  %v1678 = vpack.c.b16 %v1478, %v1470
  %v1679 = vpack.c.b16 %v1479, %v1471
  %v1680 = vpack.c.b16 %v1480, %v1472
  %v1681 = vpack.c.b16 %v1481, %v1473
  %v1682 = vpack.c.b16 %v1490, %v1482
  %v1683 = vpack.c.b16 %v1491, %v1483
  %v1684 = vpack.c.b16 %v1492, %v1484
  %v1685 = vpack.c.b16 %v1493, %v1485
  %v1686 = vpack.c.b16 %v1494, %v1486
  %v1687 = vpack.c.b16 %v1495, %v1487
  %v1688 = vpack.c.b16 %v1496, %v1488
  %v1689 = vpack.c.b16 %v1497, %v1489
  %v1690 = vpack.c.b16 %v1506, %v1498
  %v1691 = vpack.c.b16 %v1507, %v1499
  %v1692 = vpack.c.b16 %v1508, %v1500
  %v1693 = vpack.c.b16 %v1509, %v1501
  %v1694 = vpack.c.b16 %v1510, %v1502
  %v1695 = vpack.c.b16 %v1511, %v1503
  %v1696 = vpack.c.b16 %v1512, %v1504
  %v1697 = vpack.c.b16 %v1513, %v1505
  %v1698 = vpack.c.b16 %v1522, %v1514
  %v1699 = vpack.c.b16 %v1523, %v1515
  %v1700 = vpack.c.b16 %v1524, %v1516
  %v1701 = vpack.c.b16 %v1525, %v1517
  %v1702 = vpack.c.b16 %v1526, %v1518
  %v1703 = vpack.c.b16 %v1527, %v1519
  %v1704 = vpack.c.b16 %v1528, %v1520
  %v1705 = vpack.c.b16 %v1529, %v1521
  %v1706 = vpack.c.b16 %v1538, %v1530
  %v1707 = vpack.c.b16 %v1539, %v1531
  %v1708 = vpack.c.b16 %v1540, %v1532
  %v1709 = vpack.c.b16 %v1541, %v1533
  %v1710 = vpack.c.b16 %v1542, %v1534
  %v1711 = vpack.c.b16 %v1543, %v1535
  %v1712 = vpack.c.b16 %v1544, %v1536
  %v1713 = vpack.c.b16 %v1545, %v1537
  %v1714 = vpack.c.b16 %v1554, %v1546
  %v1715 = vpack.c.b16 %v1555, %v1547
  %v1716 = vpack.c.b16 %v1556, %v1548
  %v1717 = vpack.c.b16 %v1557, %v1549
  %v1718 = vpack.c.b16 %v1558, %v1550
  %v1719 = vpack.c.b16 %v1559, %v1551
  %v1720 = vpack.c.b16 %v1560, %v1552
  %v1721 = vpack.c.b16 %v1561, %v1553
  %v1722 = vpack.c.b16 %v1570, %v1562
  %v1723 = vpack.c.b16 %v1571, %v1563
  %v1724 = vpack.c.b16 %v1572, %v1564
  %v1725 = vpack.c.b16 %v1573, %v1565
  %v1726 = vpack.c.b16 %v1574, %v1566
  %v1727 = vpack.c.b16 %v1575, %v1567
  %v1728 = vpack.c.b16 %v1576, %v1568
  %v1729 = vpack.c.b16 %v1577, %v1569
  %v1730 = vpack.c.b16 %v1586, %v1578
  %v1731 = vpack.c.b16 %v1587, %v1579
  %v1732 = vpack.c.b16 %v1588, %v1580
  %v1733 = vpack.c.b16 %v1589, %v1581
  %v1734 = vpack.c.b16 %v1590, %v1582
  %v1735 = vpack.c.b16 %v1591, %v1583
  %v1736 = vpack.c.b16 %v1592, %v1584
  %v1737 = vpack.c.b16 %v1593, %v1585
  %v1738 = vpack.c.b16 %v1602, %v1594
  %v1739 = vpack.c.b16 %v1603, %v1595
  %v1740 = vpack.c.b16 %v1604, %v1596
  %v1741 = vpack.c.b16 %v1605, %v1597
  %v1742 = vpack.c.b16 %v1606, %v1598
  %v1743 = vpack.c.b16 %v1607, %v1599
  %v1744 = vpack.c.b16 %v1608, %v1600
  %v1745 = vpack.c.b16 %v1609, %v1601
  %v1746 = vpack.c.b16 %v1618, %v1610
  %v1747 = vpack.c.b16 %v1619, %v1611
  %v1748 = vpack.c.b16 %v1620, %v1612
  %v1749 = vpack.c.b16 %v1621, %v1613
  %v1750 = vpack.c.b16 %v1622, %v1614
  %v1751 = vpack.c.b16 %v1623, %v1615
  %v1752 = vpack.c.b16 %v1624, %v1616
  %v1753 = vpack.c.b16 %v1625, %v1617
  %1882 = vmatprep.subr.bf16.mxu0 %v1627
  %1883 = vmatpush1.bf16.msra.mxu0 %v1626
  %1884 = vmatprep.subr.bf16.mxu0 %v1635
  %1885 = vmatpush1.bf16.msra.mxu0 %v1634
  %1886 = vmatprep.subr.bf16.mxu0 %v1643
  %1887 = vmatpush1.bf16.msra.mxu0 %v1642
  %1888 = vmatprep.subr.bf16.mxu0 %v1651
  %1889 = vmatpush1.bf16.msra.mxu0 %v1650
  %1890 = vmatprep.subr.bf16.mxu0 %v1659
  %1891 = vmatpush1.bf16.msra.mxu0 %v1658
  %1892 = vmatprep.subr.bf16.mxu0 %v1667
  %1893 = vmatpush1.bf16.msra.mxu0 %v1666
  %1894 = vmatprep.subr.bf16.mxu0 %v1675
  %1895 = vmatpush1.bf16.msra.mxu0 %v1674
  %1896 = vmatprep.subr.bf16.mxu0 %v1683
  %1897 = vmatpush1.bf16.msra.mxu0 %v1682
  %1898 = vmatprep.subr.bf16.mxu0 %v1691
  %1899 = vmatpush1.bf16.msra.mxu0 %v1690
  %1900 = vmatprep.subr.bf16.mxu0 %v1699
  %1901 = vmatpush1.bf16.msra.mxu0 %v1698
  %1902 = vmatprep.subr.bf16.mxu0 %v1707
  %1903 = vmatpush1.bf16.msra.mxu0 %v1706
  %1904 = vmatprep.subr.bf16.mxu0 %v1715
  %1905 = vmatpush1.bf16.msra.mxu0 %v1714
  %1906 = vmatprep.subr.bf16.mxu0 %v1723
  %1907 = vmatpush1.bf16.msra.mxu0 %v1722
  %1908 = vmatprep.subr.bf16.mxu0 %v1731
  %1909 = vmatpush1.bf16.msra.mxu0 %v1730
  %1910 = vmatprep.subr.bf16.mxu0 %v1739
  %1911 = vmatpush1.bf16.msra.mxu0 %v1738
  %1912 = vmatprep.subr.bf16.mxu0 %v1747
  %1913 = vmatpush1.bf16.msra.mxu0 %v1746
  %1914 = vmatprep.mubr.bf16.mxu0 %v1071
  %1915 = vmatmul.mubr.bf16.gmra.mrb[0].mxu0 %v1070
  %v1916 = vpop.f32.mrb[0].mxu0
  %v1917 = vadd.f32 %v1205, %v1916
  %v1918 = vpop.f32.mrb[0].mxu0
  %v1919 = vadd.f32 %v1209, %v1918
  %v1920 = vpop.f32.mrb[0].mxu0
  %v1921 = vpop.f32.mrb[0].mxu0
  %1922 = vdwg.mxu0
  %1923 = vmatprep.subr.bf16.mxu0 %v1629
  %1924 = vmatpush1.bf16.msra.mxu0 %v1628
  %1925 = vmatprep.subr.bf16.mxu0 %v1637
  %1926 = vmatpush1.bf16.msra.mxu0 %v1636
  %1927 = vmatprep.subr.bf16.mxu0 %v1645
  %1928 = vmatpush1.bf16.msra.mxu0 %v1644
  %1929 = vmatprep.subr.bf16.mxu0 %v1653
  %1930 = vmatpush1.bf16.msra.mxu0 %v1652
  %1931 = vmatprep.subr.bf16.mxu0 %v1661
  %1932 = vmatpush1.bf16.msra.mxu0 %v1660
  %1933 = vmatprep.subr.bf16.mxu0 %v1669
  %1934 = vmatpush1.bf16.msra.mxu0 %v1668
  %1935 = vmatprep.subr.bf16.mxu0 %v1677
  %1936 = vmatpush1.bf16.msra.mxu0 %v1676
  %1937 = vmatprep.subr.bf16.mxu0 %v1685
  %1938 = vmatpush1.bf16.msra.mxu0 %v1684
  %1939 = vmatprep.subr.bf16.mxu0 %v1693
  %1940 = vmatpush1.bf16.msra.mxu0 %v1692
  %1941 = vmatprep.subr.bf16.mxu0 %v1701
  %1942 = vmatpush1.bf16.msra.mxu0 %v1700
  %1943 = vmatprep.subr.bf16.mxu0 %v1709
  %1944 = vmatpush1.bf16.msra.mxu0 %v1708
  %1945 = vmatprep.subr.bf16.mxu0 %v1717
  %1946 = vmatpush1.bf16.msra.mxu0 %v1716
  %1947 = vmatprep.subr.bf16.mxu0 %v1725
  %1948 = vmatpush1.bf16.msra.mxu0 %v1724
  %1949 = vmatprep.subr.bf16.mxu0 %v1733
  %1950 = vmatpush1.bf16.msra.mxu0 %v1732
  %1951 = vmatprep.subr.bf16.mxu0 %v1741
  %1952 = vmatpush1.bf16.msra.mxu0 %v1740
  %1953 = vmatprep.subr.bf16.mxu0 %v1749
  %1954 = vmatpush1.bf16.msra.mxu0 %v1748
  %1955 = vmatprep.mubr.bf16.mxu0 %v1071
  %1956 = vmatmul.mubr.bf16.gmra.mrb[0].mxu0 %v1070
  %v1957 = vpop.f32.mrb[0].mxu0
  %v1958 = vadd.f32 %v1213, %v1957
  %v1959 = vpop.f32.mrb[0].mxu0
  %v1960 = vadd.f32 %v1217, %v1959
  %v1961 = vpop.f32.mrb[0].mxu0
  %v1962 = vpop.f32.mrb[0].mxu0
  %1963 = vdwg.mxu0
  %1964 = vmatprep.subr.bf16.mxu0 %v1631
  %1965 = vmatpush1.bf16.msra.mxu0 %v1630
  %1966 = vmatprep.subr.bf16.mxu0 %v1639
  %1967 = vmatpush1.bf16.msra.mxu0 %v1638
  %1968 = vmatprep.subr.bf16.mxu0 %v1647
  %1969 = vmatpush1.bf16.msra.mxu0 %v1646
  %1970 = vmatprep.subr.bf16.mxu0 %v1655
  %1971 = vmatpush1.bf16.msra.mxu0 %v1654
  %1972 = vmatprep.subr.bf16.mxu0 %v1663
  %1973 = vmatpush1.bf16.msra.mxu0 %v1662
  %1974 = vmatprep.subr.bf16.mxu0 %v1671
  %1975 = vmatpush1.bf16.msra.mxu0 %v1670
  %1976 = vmatprep.subr.bf16.mxu0 %v1679
  %1977 = vmatpush1.bf16.msra.mxu0 %v1678
  %1978 = vmatprep.subr.bf16.mxu0 %v1687
  %1979 = vmatpush1.bf16.msra.mxu0 %v1686
  %1980 = vmatprep.subr.bf16.mxu0 %v1695
  %1981 = vmatpush1.bf16.msra.mxu0 %v1694
  %1982 = vmatprep.subr.bf16.mxu0 %v1703
  %1983 = vmatpush1.bf16.msra.mxu0 %v1702
  %1984 = vmatprep.subr.bf16.mxu0 %v1711
  %1985 = vmatpush1.bf16.msra.mxu0 %v1710
  %1986 = vmatprep.subr.bf16.mxu0 %v1719
  %1987 = vmatpush1.bf16.msra.mxu0 %v1718
  %1988 = vmatprep.subr.bf16.mxu0 %v1727
  %1989 = vmatpush1.bf16.msra.mxu0 %v1726
  %1990 = vmatprep.subr.bf16.mxu0 %v1735
  %1991 = vmatpush1.bf16.msra.mxu0 %v1734
  %1992 = vmatprep.subr.bf16.mxu0 %v1743
  %1993 = vmatpush1.bf16.msra.mxu0 %v1742
  %1994 = vmatprep.subr.bf16.mxu0 %v1751
  %1995 = vmatpush1.bf16.msra.mxu0 %v1750
  %1996 = vmatprep.mubr.bf16.mxu0 %v1071
  %1997 = vmatmul.mubr.bf16.gmra.mrb[0].mxu0 %v1070
  %v1998 = vpop.f32.mrb[0].mxu0
  %v1999 = vadd.f32 %v1221, %v1998
  %v2000 = vpop.f32.mrb[0].mxu0
  %v2001 = vadd.f32 %v1225, %v2000
  %v2002 = vpop.f32.mrb[0].mxu0
  %v2003 = vpop.f32.mrb[0].mxu0
  %2004 = vdwg.mxu0
  %2005 = vmatprep.subr.bf16.mxu0 %v1633
  %2006 = vmatpush1.bf16.msra.mxu0 %v1632
  %2007 = vmatprep.subr.bf16.mxu0 %v1641
  %2008 = vmatpush1.bf16.msra.mxu0 %v1640
  %2009 = vmatprep.subr.bf16.mxu0 %v1649
  %2010 = vmatpush1.bf16.msra.mxu0 %v1648
  %2011 = vmatprep.subr.bf16.mxu0 %v1657
  %2012 = vmatpush1.bf16.msra.mxu0 %v1656
  %2013 = vmatprep.subr.bf16.mxu0 %v1665
  %2014 = vmatpush1.bf16.msra.mxu0 %v1664
  %2015 = vmatprep.subr.bf16.mxu0 %v1673
  %2016 = vmatpush1.bf16.msra.mxu0 %v1672
  %2017 = vmatprep.subr.bf16.mxu0 %v1681
  %2018 = vmatpush1.bf16.msra.mxu0 %v1680
  %2019 = vmatprep.subr.bf16.mxu0 %v1689
  %2020 = vmatpush1.bf16.msra.mxu0 %v1688
  %2021 = vmatprep.subr.bf16.mxu0 %v1697
  %2022 = vmatpush1.bf16.msra.mxu0 %v1696
  %2023 = vmatprep.subr.bf16.mxu0 %v1705
  %2024 = vmatpush1.bf16.msra.mxu0 %v1704
  %2025 = vmatprep.subr.bf16.mxu0 %v1713
  %2026 = vmatpush1.bf16.msra.mxu0 %v1712
  %2027 = vmatprep.subr.bf16.mxu0 %v1721
  %2028 = vmatpush1.bf16.msra.mxu0 %v1720
  %2029 = vmatprep.subr.bf16.mxu0 %v1729
  %2030 = vmatpush1.bf16.msra.mxu0 %v1728
  %2031 = vmatprep.subr.bf16.mxu0 %v1737
  %2032 = vmatpush1.bf16.msra.mxu0 %v1736
  %2033 = vmatprep.subr.bf16.mxu0 %v1745
  %2034 = vmatpush1.bf16.msra.mxu0 %v1744
  %2035 = vmatprep.subr.bf16.mxu0 %v1753
  %2036 = vmatpush1.bf16.msra.mxu0 %v1752
  %2037 = vmatprep.mubr.bf16.mxu0 %v1071
  %2038 = vmatmul.mubr.bf16.gmra.mrb[0].mxu0 %v1070
  %v2039 = vpop.f32.mrb[0].mxu0
  %v2040 = vadd.f32 %v1229, %v2039
  %v2041 = vpop.f32.mrb[0].mxu0
  %v2042 = vadd.f32 %v1233, %v2041
  %v2043 = vpop.f32.mrb[0].mxu0
  %v2044 = vpop.f32.mrb[0].mxu0
  %2045 = vdwg.mxu0
  %v2046 = vsub.f32 %v61, %v1917
  %v2047 = vsub.f32 %v62, %v1919
  %v2048 = vsub.f32 %v63, %v1958
  %v2049 = vsub.f32 %v64, %v1960
  %v2050 = vsub.f32 %v65, %v1999
  %v2051 = vsub.f32 %v66, %v2001
  %v2052 = vsub.f32 %v67, %v2040
  %v2053 = vsub.f32 %v68, %v2042
  %v2054 = vmul.f32 %v2046, %v2046
  %v2055 = vmul.f32 %v2047, %v2047
  %v2056 = vmul.f32 %v2048, %v2048
  %v2057 = vmul.f32 %v2049, %v2049
  %v2058 = vmul.f32 %v2050, %v2050
  %v2059 = vmul.f32 %v2051, %v2051
  %v2060 = vmul.f32 %v2052, %v2052
  %v2061 = vmul.f32 %v2053, %v2053
  %v2062 = vadd.f32 %v2054, %v2055
  %v2063 = vadd.f32 %v2062, %v2056
  %v2064 = vadd.f32 %v2063, %v2057
  %v2065 = vadd.f32 %v2064, %v2058
  %v2066 = vadd.f32 %v2065, %v2059
  %v2067 = vadd.f32 %v2066, %v2060
  %v2068 = vadd.f32 %v2067, %v2061
  %2069 = vadd.xlane.f32.xlu0 %v2068
  %v2070 = vpop.xlane.xlu0 %2069
  %v2071 = vrot.slane %v2070, 4
  %v2072 = vadd.f32 %v2070, %v2071
  %v2073 = vrot.slane %v2072, 2
  %v2074 = vadd.f32 %v2072, %v2073
  %v2075 = vrot.slane %v2074, 1
  %v2076 = vadd.f32 %v2074, %v2075
  %s2077 = vtos %v2076
  %v2078 = vstv %s2077
  %2079 = vst [vmem:[%s11] sm:$0xff] %v2078
  // Predicated region
  $region46: #{ddpm_forward.3} parent=0 // pred_check
    _
  $region47: #{ddpm_forward.3} parent=0 // pred_check_branch
    %2081 = sbr.rel (0) target = $region49
  $region48: #{ddpm_forward.3} parent=0 // pred_region
    _
  $region49: #{ddpm_forward.3} parent=0 // pred_fallthru
    _
  // Predicated region
  $region50: #{ddpm_forward.3} parent=0 // pred_check
    _
  $region51: #{ddpm_forward.3} parent=0 // pred_check_branch
    %2083 = sbr.rel (0) target = $region53
  $region52: #{ddpm_forward.3} parent=0 // pred_region
    _
  $region53: #{ddpm_forward.3} parent=0 // pred_fallthru
    _

</llo_original>
